<compile_context>
chip_gen: v5e
topology: v5e:2x2
jax: 0.10.0
libtpu: 0.0.40
codegen_flags: <defaults>
</compile_context>

<pallas_src>
import jax
import jax.numpy as jnp
from jax.experimental import pallas as pl
from jax.experimental.pallas import tpu as pltpu

IN_FEATURES = 28 * 28          # 784 (full array dim, allowed as-is in BlockSpec)
H1, H2 = 300, 100
H1_PAD, H2_PAD, OUT_PAD = 384, 128, 128   # multiples of 128 (lane-dense)


def _round_up(x, m):
    return (x + m - 1) // m * m


def _mlp_kernel(x_ref, w1_ref, b1_ref, w2_ref, b2_ref, w3_ref, b3_ref, o_ref):
    # x: (TB, 784) bf16.  Weights bf16 (padded, lane-dense).  Biases f32.
    # Three MXU matmuls with f32 accumulation; bias-add / ReLU on the VPU in f32.
    x = x_ref[...]
    h1 = jnp.dot(x, w1_ref[...], preferred_element_type=jnp.float32)          # (TB, 384) f32
    h1 = jnp.maximum(h1 + b1_ref[...], 0.0)
    h2 = jnp.dot(h1.astype(jnp.bfloat16), w2_ref[...],
                 preferred_element_type=jnp.float32)                          # (TB, 128) f32
    h2 = jnp.maximum(h2 + b2_ref[...], 0.0)
    out = jnp.dot(h2.astype(jnp.bfloat16), w3_ref[...],
                  preferred_element_type=jnp.float32)                         # (TB, 128) f32
    o_ref[...] = (out + b3_ref[...]).astype(o_ref.dtype)


def init_params(key, num_classes=10):
    """nn.Linear-style init: U(-1/sqrt(fan_in), 1/sqrt(fan_in)).
    Weights stored as (in_features, out_features) (transposed vs. torch) so y = x @ W + b."""
    def linear(key, fan_in, fan_out):
        kw, kb = jax.random.split(key)
        bound = 1.0 / jnp.sqrt(float(fan_in))
        w = jax.random.uniform(kw, (fan_in, fan_out), jnp.float32, -bound, bound)
        b = jax.random.uniform(kb, (1, fan_out), jnp.float32, -bound, bound)
        return w, b

    k1, k2, k3 = jax.random.split(key, 3)
    w1, b1 = linear(k1, IN_FEATURES, H1)
    w2, b2 = linear(k2, H1, H2)
    w3, b3 = linear(k3, H2, num_classes)
    return {"w1": w1, "b1": b1, "w2": w2, "b2": b2, "w3": w3, "b3": b3}


def prepare_params_for_kernel(params):
    """Zero-pad feature dims to multiples of 128 and cast weights to bf16 (done once, at init).
    Exact: padded activations are ReLU(0)=0 and padded weight rows/cols are zero."""
    n_cls = params["w3"].shape[1]
    w1 = jnp.zeros((IN_FEATURES, H1_PAD), jnp.float32).at[:, :H1].set(params["w1"])
    b1 = jnp.zeros((1, H1_PAD), jnp.float32).at[:, :H1].set(params["b1"])
    w2 = jnp.zeros((H1_PAD, H2_PAD), jnp.float32).at[:H1, :H2].set(params["w2"])
    b2 = jnp.zeros((1, H2_PAD), jnp.float32).at[:, :H2].set(params["b2"])
    w3 = jnp.zeros((H2_PAD, OUT_PAD), jnp.float32).at[:H2, :n_cls].set(params["w3"])
    b3 = jnp.zeros((1, OUT_PAD), jnp.float32).at[:, :n_cls].set(params["b3"])
    kparams = {
        "w1": w1.astype(jnp.bfloat16), "b1": b1,
        "w2": w2.astype(jnp.bfloat16), "b2": b2,
        "w3": w3.astype(jnp.bfloat16), "b3": b3,
    }
    return kparams, n_cls


def lenet_300_100_forward(x_nchw, kparams, num_classes, block_b=512):
    """x_nchw: (B, 1, 28, 28) float32. kparams: padded bf16 weights + f32 biases."""
    B = x_nchw.shape[0]
    x = x_nchw.reshape(B, IN_FEATURES).astype(jnp.bfloat16)   # x.view(B, 28*28), bf16 for MXU

    # Batch tile: multiple of 16 (bf16 sublane packing); pad B up to a multiple of it.
    # TB=512 keeps each double-buffered x/out block well under the scoped VMEM limit on
    # every generation (v5e/v6e/v7x) while amortizing the ~0.35 us/step grid overhead.
    tb = min(block_b, _round_up(B, 16))
    b_pad = _round_up(B, tb)
    if b_pad != B:
        x = jnp.pad(x, ((0, b_pad - B), (0, 0)))

    const = lambda i: (0, 0)   # weights/biases: same block every step -> DMA'd once, VMEM-resident

    out = pl.pallas_call(
        _mlp_kernel,
        out_shape=jax.ShapeDtypeStruct((b_pad, OUT_PAD), jnp.float32),
        grid=(pl.cdiv(b_pad, tb),),
        in_specs=[
            pl.BlockSpec((tb, IN_FEATURES), lambda i: (i, 0)),   # x: streamed over batch
            pl.BlockSpec((IN_FEATURES, H1_PAD), const),
            pl.BlockSpec((1, H1_PAD), const),
            pl.BlockSpec((H1_PAD, H2_PAD), const),
            pl.BlockSpec((1, H2_PAD), const),
            pl.BlockSpec((H2_PAD, OUT_PAD), const),
            pl.BlockSpec((1, OUT_PAD), const),
        ],
        out_specs=pl.BlockSpec((tb, OUT_PAD), lambda i: (i, 0)),  # lane-dense (128-wide) stores
        compiler_params=pltpu.CompilerParams(
            dimension_semantics=("parallel",),          # shard batch loop across TCs (v7x: 2 TCs)
            vmem_limit_bytes=32 * 1024 * 1024,          # explicit; safe on v5e/v6e/v7x, >> needs
        ),
    )(x, kparams["w1"], kparams["b1"], kparams["w2"], kparams["b2"],
      kparams["w3"], kparams["b3"])

    return out[:B, :num_classes]   # drop batch padding and the 118 zero-padded logit columns


def _reference_forward_bf16(x_nchw, params):
    """Pure-JAX reference using the same bf16-input / f32-accumulate math as the kernel."""
    x = x_nchw.reshape(x_nchw.shape[0], IN_FEATURES).astype(jnp.bfloat16)
    h = jnp.dot(x, params["w1"].astype(jnp.bfloat16), preferred_element_type=jnp.float32)
    h = jnp.maximum(h + params["b1"], 0.0)
    h = jnp.dot(h.astype(jnp.bfloat16), params["w2"].astype(jnp.bfloat16),
                preferred_element_type=jnp.float32)
    h = jnp.maximum(h + params["b2"], 0.0)
    out = jnp.dot(h.astype(jnp.bfloat16), params["w3"].astype(jnp.bfloat16),
                  preferred_element_type=jnp.float32)
    return out + params["b3"]


if __name__ == "__main__":
    key = jax.random.PRNGKey(0)
    k_param, k_x = jax.random.split(key)

    params = init_params(k_param, num_classes=10)
    kparams, num_classes = prepare_params_for_kernel(params)

    # Small batch, MNIST-like NCHW input (28x28 is required by the module's view()).
    x = jax.random.normal(k_x, (2, 1, 28, 28), dtype=jnp.float32)

    out = lenet_300_100_forward(x, kparams, num_classes)
    out = jax.block_until_ready(out)

    ref = _reference_forward_bf16(x, params)
    assert out.shape == (2, 10)
    assert jnp.allclose(out, ref, atol=1e-2, rtol=1e-2)

    print("KERNEL_OK")
</pallas_src>

<mosaic_0001>
module attributes {stable_mosaic.version = 11 : i64} {
  func.func @_mlp_kernel(%arg0: i32, %arg1: memref<16x784xbf16, #tpu.memory_space<vmem>>, %arg2: memref<784x384xbf16, #tpu.memory_space<vmem>>, %arg3: memref<1x384xf32, #tpu.memory_space<vmem>>, %arg4: memref<384x128xbf16, #tpu.memory_space<vmem>>, %arg5: memref<1x128xf32, #tpu.memory_space<vmem>>, %arg6: memref<128x128xbf16, #tpu.memory_space<vmem>>, %arg7: memref<1x128xf32, #tpu.memory_space<vmem>>, %arg8: memref<16x128xf32, #tpu.memory_space<vmem>>) attributes {dimension_semantics = [#tpu.dimension_semantics<parallel>], iteration_bounds = array<i64: 1>, scalar_prefetch = 0 : i64, scratch_operands = 0 : i64, tpu.core_type = #tpu.core_type<tc>, window_params = [{transform_indices = @transform_0, window_bounds = array<i64: 16, 784>}, {pipeline_mode = #tpu.pipeline_mode<synchronous>, transform_indices = @transform_1, window_bounds = array<i64: 784, 384>}, {pipeline_mode = #tpu.pipeline_mode<synchronous>, transform_indices = @transform_2, window_bounds = array<i64: 1, 384>}, {pipeline_mode = #tpu.pipeline_mode<synchronous>, transform_indices = @transform_3, window_bounds = array<i64: 384, 128>}, {pipeline_mode = #tpu.pipeline_mode<synchronous>, transform_indices = @transform_4, window_bounds = array<i64: 1, 128>}, {pipeline_mode = #tpu.pipeline_mode<synchronous>, transform_indices = @transform_5, window_bounds = array<i64: 128, 128>}, {pipeline_mode = #tpu.pipeline_mode<synchronous>, transform_indices = @transform_6, window_bounds = array<i64: 1, 128>}, {transform_indices = @transform_7, window_bounds = array<i64: 16, 128>}]} {
    %c0 = arith.constant 0 : index
    %c0_0 = arith.constant 0 : index
    %0 = vector.load %arg1[%c0, %c0_0] : memref<16x784xbf16, #tpu.memory_space<vmem>>, vector<16x784xbf16>
    %c0_1 = arith.constant 0 : index
    %c0_2 = arith.constant 0 : index
    %1 = vector.load %arg2[%c0_1, %c0_2] : memref<784x384xbf16, #tpu.memory_space<vmem>>, vector<784x384xbf16>
    %cst = arith.constant dense<0.000000e+00> : vector<16x384xf32>
    %2 = tpu.matmul %0, %1, %cst {dimension_numbers = #tpu.dot_dimension_numbers<[1], [0], [0], [1], [0, 0, 1, 1], [], []>} : vector<16x784xbf16>, vector<784x384xbf16>, vector<16x384xf32> -> vector<16x384xf32>
    %c0_3 = arith.constant 0 : index
    %c0_4 = arith.constant 0 : index
    %3 = vector.load %arg3[%c0_3, %c0_4] : memref<1x384xf32, #tpu.memory_space<vmem>>, vector<1x384xf32>
    %4 = vector.broadcast %3 : vector<1x384xf32> to vector<16x384xf32>
    %5 = arith.addf %2, %4 : vector<16x384xf32>
    %cst_5 = arith.constant 0.000000e+00 : f32
    %6 = vector.broadcast %cst_5 : f32 to vector<16x384xf32>
    %7 = arith.maximumf %5, %6 : vector<16x384xf32>
    %8 = arith.truncf %7 : vector<16x384xf32> to vector<16x384xbf16>
    %c0_6 = arith.constant 0 : index
    %c0_7 = arith.constant 0 : index
    %9 = vector.load %arg4[%c0_6, %c0_7] : memref<384x128xbf16, #tpu.memory_space<vmem>>, vector<384x128xbf16>
    %cst_8 = arith.constant dense<0.000000e+00> : vector<16x128xf32>
    %10 = tpu.matmul %8, %9, %cst_8 {dimension_numbers = #tpu.dot_dimension_numbers<[1], [0], [0], [1], [0, 0, 1, 1], [], []>} : vector<16x384xbf16>, vector<384x128xbf16>, vector<16x128xf32> -> vector<16x128xf32>
    %c0_9 = arith.constant 0 : index
    %c0_10 = arith.constant 0 : index
    %11 = vector.load %arg5[%c0_9, %c0_10] : memref<1x128xf32, #tpu.memory_space<vmem>>, vector<1x128xf32>
    %12 = vector.broadcast %11 : vector<1x128xf32> to vector<16x128xf32>
    %13 = arith.addf %10, %12 : vector<16x128xf32>
    %cst_11 = arith.constant 0.000000e+00 : f32
    %14 = vector.broadcast %cst_11 : f32 to vector<16x128xf32>
    %15 = arith.maximumf %13, %14 : vector<16x128xf32>
    %16 = arith.truncf %15 : vector<16x128xf32> to vector<16x128xbf16>
    %c0_12 = arith.constant 0 : index
    %c0_13 = arith.constant 0 : index
    %17 = vector.load %arg6[%c0_12, %c0_13] : memref<128x128xbf16, #tpu.memory_space<vmem>>, vector<128x128xbf16>
    %cst_14 = arith.constant dense<0.000000e+00> : vector<16x128xf32>
    %18 = tpu.matmul %16, %17, %cst_14 {dimension_numbers = #tpu.dot_dimension_numbers<[1], [0], [0], [1], [0, 0, 1, 1], [], []>} : vector<16x128xbf16>, vector<128x128xbf16>, vector<16x128xf32> -> vector<16x128xf32>
    %c0_15 = arith.constant 0 : index
    %c0_16 = arith.constant 0 : index
    %19 = vector.load %arg7[%c0_15, %c0_16] : memref<1x128xf32, #tpu.memory_space<vmem>>, vector<1x128xf32>
    %20 = vector.broadcast %19 : vector<1x128xf32> to vector<16x128xf32>
    %21 = arith.addf %18, %20 : vector<16x128xf32>
    %c0_17 = arith.constant 0 : index
    %c0_18 = arith.constant 0 : index
    %22 = vector.load %arg8[%c0_17, %c0_18] : memref<16x128xf32, #tpu.memory_space<vmem>>, vector<16x128xf32>
    tpu.vector_store %arg8[%c0_17, %c0_18], %21 {strides = array<i32>} : memref<16x128xf32, #tpu.memory_space<vmem>>, vector<16x128xf32>,
    return
  }
  func.func @transform_0(%arg0: i32) -> (i32, i32) {
    %c0_i32 = arith.constant 0 : i32
    %c0_i32_0 = arith.constant 0 : i32
    return %arg0, %c0_i32 : i32, i32
  }
  func.func @transform_1(%arg0: i32) -> (i32, i32) {
    %c0_i32 = arith.constant 0 : i32
    %c0_i32_0 = arith.constant 0 : i32
    %c0_i32_1 = arith.constant 0 : i32
    return %c0_i32, %c0_i32_0 : i32, i32
  }
  func.func @transform_2(%arg0: i32) -> (i32, i32) {
    %c0_i32 = arith.constant 0 : i32
    %c0_i32_0 = arith.constant 0 : i32
    %c0_i32_1 = arith.constant 0 : i32
    return %c0_i32, %c0_i32_0 : i32, i32
  }
  func.func @transform_3(%arg0: i32) -> (i32, i32) {
    %c0_i32 = arith.constant 0 : i32
    %c0_i32_0 = arith.constant 0 : i32
    %c0_i32_1 = arith.constant 0 : i32
    return %c0_i32, %c0_i32_0 : i32, i32
  }
  func.func @transform_4(%arg0: i32) -> (i32, i32) {
    %c0_i32 = arith.constant 0 : i32
    %c0_i32_0 = arith.constant 0 : i32
    %c0_i32_1 = arith.constant 0 : i32
    return %c0_i32, %c0_i32_0 : i32, i32
  }
  func.func @transform_5(%arg0: i32) -> (i32, i32) {
    %c0_i32 = arith.constant 0 : i32
    %c0_i32_0 = arith.constant 0 : i32
    %c0_i32_1 = arith.constant 0 : i32
    return %c0_i32, %c0_i32_0 : i32, i32
  }
  func.func @transform_6(%arg0: i32) -> (i32, i32) {
    %c0_i32 = arith.constant 0 : i32
    %c0_i32_0 = arith.constant 0 : i32
    %c0_i32_1 = arith.constant 0 : i32
    return %c0_i32, %c0_i32_0 : i32, i32
  }
  func.func @transform_7(%arg0: i32) -> (i32, i32) {
    %c0_i32 = arith.constant 0 : i32
    %c0_i32_0 = arith.constant 0 : i32
    return %arg0, %c0_i32 : i32, i32
  }
}

</mosaic_0001>

<llo_original>
// kernel: tpu_custom_call.1
$region0: #{tpu_custom_call.1}
  #allocation0 [shape = 'u32[]', space=smem, size = 0x4, offset = 0x4, fixed_abs, tag = 'smem constant byte address 0x4 - core index']
  #allocation1 [shape = 'u32[72,128]{1,0:T(1,128)}', space=vmem, size = 0x9000, scoped, tag = 'internal scratch']
  %s0 = inlined_call_operand.hbm [shape: bf16[16,784], index: 0, kind: input, shape index: {}]
  %s1 = inlined_call_operand.hbm [shape: bf16[784,384], index: 1, kind: input, shape index: {}]
  %s2 = inlined_call_operand.hbm [shape: f32[1,384], index: 2, kind: input, shape index: {}]
  %s3 = inlined_call_operand.hbm [shape: bf16[384,128], index: 3, kind: input, shape index: {}]
  %s4 = inlined_call_operand.vmem [shape: f32[1,128], index: 4, kind: input, shape index: {}]
  %s5 = inlined_call_operand.hbm [shape: bf16[128,128], index: 5, kind: input, shape index: {}]
  %s6 = inlined_call_operand.vmem [shape: f32[1,128], index: 6, kind: input, shape index: {}]
  %s7 = inlined_call_operand.hbm [shape: f32[16,128], index: 7, kind: output, shape index: {}]
  %s8 = sld [smem:[#allocation0]]
  $region58: #{tpu_custom_call.1} parent=0
    _
  %s10 = ssub.s32 1, %s8
  %s11 = scalar_select 0, %s10, %s8
  $region1: #{tpu_custom_call.1} parent=0
    #allocation2 [shape = 'u8[28672]{0}', space=vmem, size = 0x7000, scoped, tag = 'input window, operand 0, single buffered']
    #allocation3 [shape = 's32[1]{0}', space=sflag, size = 0x4, scoped, tag = 'scoped memory for tpu_custom_call.1']
    #allocation4 [shape = 's32[1]{0}', space=sflag, size = 0x4, scoped, tag = 'scoped memory for tpu_custom_call.1']
    #allocation5 [shape = 'u8[602112]{0}', space=vmem, size = 0x93000, scoped, tag = 'input window, operand 1, single buffered']
    #allocation6 [shape = 's32[1]{0}', space=sflag, size = 0x4, scoped, tag = 'scoped memory for tpu_custom_call.1']
    #allocation7 [shape = 'u8[1536]{0}', space=vmem, size = 0x800, scoped, tag = 'input window, operand 2, single buffered']
    #allocation8 [shape = 'u8[98304]{0}', space=vmem, size = 0x18000, scoped, tag = 'input window, operand 3, single buffered']
    #allocation9 [shape = 's32[1]{0}', space=sflag, size = 0x4, scoped, tag = 'scoped memory for tpu_custom_call.1']
    #allocation10 [shape = 'u8[32768]{0}', space=vmem, size = 0x8000, scoped, tag = 'input window, operand 5, single buffered']
    #allocation11 [shape = 'u8[8192]{0}', space=vmem, size = 0x2000, scoped, tag = 'output window, operand 0, single buffered']
    %12 = vsyncpa [#allocation3], 0
    %13 = vsyncpa [#allocation6], 0
    %14 = vsyncpa [#allocation9], 0
    %15 = vsyncpa [#allocation4], 0
    // Predicated region
    $region2: #{tpu_custom_call.1} parent=1 // pred_check
      _
    $region3: #{tpu_custom_call.1} parent=1 // pred_check_branch
      %17 = sbr.rel (0) target = $region5
    $region4: #{tpu_custom_call.1} parent=1 // pred_region
      %19 = vsyncadd [#allocation3], 0
      %s20 = sshll.u32 %s0, 4
      %s21 = int_to_ptr.hbm [resolvable:$true] %s20
      %s22 = sshll.u32 [#allocation2], 4
      %s23 = int_to_ptr.vmem [resolvable:$true] %s22
      %28 = dma.hbm_to_vmem [thread:$0]  %s21, 896, %s23, [#allocation3], 448, 448, 28
    $region5: #{tpu_custom_call.1} parent=1 // pred_fallthru
      _
    // Predicated region
    $region6: #{tpu_custom_call.1} parent=1 // pred_check
      _
    $region7: #{tpu_custom_call.1} parent=1 // pred_check_branch
      %30 = sbr.rel (0) target = $region9
    $region8: #{tpu_custom_call.1} parent=1 // pred_region
      %32 = vsyncadd [#allocation6], 0
      %s33 = sshll.u32 %s1, 4
      %s34 = int_to_ptr.hbm [resolvable:$true] %s33
      %s35 = sshll.u32 [#allocation5], 4
      %s36 = int_to_ptr.vmem [resolvable:$true] %s35
      %41 = dma.hbm_to_vmem [thread:$0]  %s34, 18816, %s36, [#allocation6], 192, 192, 12
    $region9: #{tpu_custom_call.1} parent=1 // pred_fallthru
      _
    // Predicated region
    $region10: #{tpu_custom_call.1} parent=1 // pred_check
      _
    $region11: #{tpu_custom_call.1} parent=1 // pred_check_branch
      %43 = sbr.rel (0) target = $region13
    $region12: #{tpu_custom_call.1} parent=1 // pred_region
      %45 = vsyncadd [#allocation6], 0
      %s47 = sshll.u32 %s2, 4
      %s48 = int_to_ptr.hbm [resolvable:$true] %s47
      %s49 = sshll.u32 [#allocation7], 4
      %s50 = int_to_ptr.vmem [resolvable:$true] %s49
      %52 = dma.hbm_to_vmem [thread:$0]  %s48, 48, %s50, [#allocation6]
    $region13: #{tpu_custom_call.1} parent=1 // pred_fallthru
      _
    // Predicated region
    $region14: #{tpu_custom_call.1} parent=1 // pred_check
      _
    $region15: #{tpu_custom_call.1} parent=1 // pred_check_branch
      %54 = sbr.rel (0) target = $region17
    $region16: #{tpu_custom_call.1} parent=1 // pred_region
      %56 = vsyncadd [#allocation9], 0
      %s57 = sshll.u32 %s3, 4
      %s58 = int_to_ptr.hbm [resolvable:$true] %s57
      %s59 = sshll.u32 [#allocation8], 4
      %s60 = int_to_ptr.vmem [resolvable:$true] %s59
      %65 = dma.hbm_to_vmem [thread:$0]  %s58, 3072, %s60, [#allocation9], 64, 64, 4
    $region17: #{tpu_custom_call.1} parent=1 // pred_fallthru
      _
    // Predicated region
    $region18: #{tpu_custom_call.1} parent=1 // pred_check
      _
    $region19: #{tpu_custom_call.1} parent=1 // pred_check_branch
      %67 = sbr.rel (0) target = $region21
    $region20: #{tpu_custom_call.1} parent=1 // pred_region
      _
    $region21: #{tpu_custom_call.1} parent=1 // pred_fallthru
      _
    // Predicated region
    $region22: #{tpu_custom_call.1} parent=1 // pred_check
      _
    $region23: #{tpu_custom_call.1} parent=1 // pred_check_branch
      %69 = sbr.rel (0) target = $region25
    $region24: #{tpu_custom_call.1} parent=1 // pred_region
      %71 = vsyncadd [#allocation9], 0
      %s72 = sshll.u32 %s5, 4
      %s73 = int_to_ptr.hbm [resolvable:$true] %s72
      %s74 = sshll.u32 [#allocation10], 4
      %s75 = int_to_ptr.vmem [resolvable:$true] %s74
      %80 = dma.hbm_to_vmem [thread:$0]  %s73, 1024, %s75, [#allocation9], 64, 64, 4
    $region25: #{tpu_custom_call.1} parent=1 // pred_fallthru
      _
    // Predicated region
    $region26: #{tpu_custom_call.1} parent=1 // pred_check
      _
    $region27: #{tpu_custom_call.1} parent=1 // pred_check_branch
      %82 = sbr.rel (0) target = $region29
    $region28: #{tpu_custom_call.1} parent=1 // pred_region
      _
    $region29: #{tpu_custom_call.1} parent=1 // pred_fallthru
      _
    // Predicated region
    $region30: #{tpu_custom_call.1} parent=1 // pred_check
      _
    $region31: #{tpu_custom_call.1} parent=1 // pred_check_branch
      %84 = sbr.rel (0) target = $region33
    $region32: #{tpu_custom_call.1} parent=1 // pred_region
      %86 = dma.done [#allocation3], 896
    $region33: #{tpu_custom_call.1} parent=1 // pred_fallthru
      _
    // Predicated region
    $region34: #{tpu_custom_call.1} parent=1 // pred_check
      _
    $region35: #{tpu_custom_call.1} parent=1 // pred_check_branch
      %88 = sbr.rel (0) target = $region37
    $region36: #{tpu_custom_call.1} parent=1 // pred_region
      %90 = dma.done [#allocation6], 18816
    $region37: #{tpu_custom_call.1} parent=1 // pred_fallthru
      _
    // Predicated region
    $region38: #{tpu_custom_call.1} parent=1 // pred_check
      _
    $region39: #{tpu_custom_call.1} parent=1 // pred_check_branch
      %92 = sbr.rel (0) target = $region41
    $region40: #{tpu_custom_call.1} parent=1 // pred_region
      %94 = dma.done [#allocation6], 48
    $region41: #{tpu_custom_call.1} parent=1 // pred_fallthru
      _
    // Predicated region
    $region42: #{tpu_custom_call.1} parent=1 // pred_check
      _
    $region43: #{tpu_custom_call.1} parent=1 // pred_check_branch
      %96 = sbr.rel (0) target = $region45
    $region44: #{tpu_custom_call.1} parent=1 // pred_region
      %98 = dma.done [#allocation9], 3072
    $region45: #{tpu_custom_call.1} parent=1 // pred_fallthru
      _
    // Predicated region
    $region46: #{tpu_custom_call.1} parent=1 // pred_check
      _
    $region47: #{tpu_custom_call.1} parent=1 // pred_check_branch
      %100 = sbr.rel (0) target = $region49
    $region48: #{tpu_custom_call.1} parent=1 // pred_region
      %102 = dma.done [#allocation9], 1024
    $region49: #{tpu_custom_call.1} parent=1 // pred_fallthru
      _
    %v104 = vld [vmem:[#allocation2] sm:$0xff]
    %v105 = vld [vmem:[#allocation2 + $0x8] sm:$0xff]
    %v106 = vld [vmem:[#allocation2 + $0x10] sm:$0xff]
    %v107 = vld [vmem:[#allocation2 + $0x18] sm:$0xf]
    %v108 = vld [vmem:[#allocation2 + $0x1c] sm:$0xff]
    %v109 = vld [vmem:[#allocation2 + $0x24] sm:$0xff]
    %v110 = vld [vmem:[#allocation2 + $0x2c] sm:$0xff]
    %v111 = vld [vmem:[#allocation2 + $0x34] sm:$0xf]
    %v112 = vld [vmem:[#allocation5] sm:$0xff]
    %v113 = vld [vmem:[#allocation5 + $0x8] sm:$0xf]
    %v114 = vld [vmem:[#allocation5 + $0xc] sm:$0xff]
    %v115 = vld [vmem:[#allocation5 + $0x14] sm:$0xf]
    %v116 = vld [vmem:[#allocation5 + $0x18] sm:$0xff]
    %v117 = vld [vmem:[#allocation5 + $0x20] sm:$0xf]
    %v118 = vld [vmem:[#allocation5 + $0x24] sm:$0xff]
    %v119 = vld [vmem:[#allocation5 + $0x2c] sm:$0xf]
    %v120 = vld [vmem:[#allocation5 + $0x30] sm:$0xff]
    %v121 = vld [vmem:[#allocation5 + $0x38] sm:$0xf]
    %v122 = vld [vmem:[#allocation5 + $0x3c] sm:$0xff]
    %v123 = vld [vmem:[#allocation5 + $0x44] sm:$0xf]
    %v124 = vld [vmem:[#allocation5 + $0x48] sm:$0xff]
    %v125 = vld [vmem:[#allocation5 + $0x50] sm:$0xf]
    %v126 = vld [vmem:[#allocation5 + $0x54] sm:$0xff]
    %v127 = vld [vmem:[#allocation5 + $0x5c] sm:$0xf]
    %v128 = vld [vmem:[#allocation5 + $0x60] sm:$0xff]
    %v129 = vld [vmem:[#allocation5 + $0x68] sm:$0xf]
    %v130 = vld [vmem:[#allocation5 + $0x6c] sm:$0xff]
    %v131 = vld [vmem:[#allocation5 + $0x74] sm:$0xf]
    %v132 = vld [vmem:[#allocation5 + $0x78] sm:$0xff]
    %v133 = vld [vmem:[#allocation5 + $0x80] sm:$0xf]
    %v134 = vld [vmem:[#allocation5 + $0x84] sm:$0xff]
    %v135 = vld [vmem:[#allocation5 + $0x8c] sm:$0xf]
    %v136 = vld [vmem:[#allocation5 + $0x90] sm:$0xff]
    %v137 = vld [vmem:[#allocation5 + $0x98] sm:$0xf]
    %v138 = vld [vmem:[#allocation5 + $0x9c] sm:$0xff]
    %v139 = vld [vmem:[#allocation5 + $0xa4] sm:$0xf]
    %v140 = vld [vmem:[#allocation5 + $0xa8] sm:$0xff]
    %v141 = vld [vmem:[#allocation5 + $0xb0] sm:$0xf]
    %v142 = vld [vmem:[#allocation5 + $0xb4] sm:$0xff]
    %v143 = vld [vmem:[#allocation5 + $0xbc] sm:$0xf]
    %v144 = vld [vmem:[#allocation5 + $0xc0] sm:$0xff]
    %v145 = vld [vmem:[#allocation5 + $0xc8] sm:$0xf]
    %v146 = vld [vmem:[#allocation5 + $0xcc] sm:$0xff]
    %v147 = vld [vmem:[#allocation5 + $0xd4] sm:$0xf]
    %v148 = vld [vmem:[#allocation5 + $0xd8] sm:$0xff]
    %v149 = vld [vmem:[#allocation5 + $0xe0] sm:$0xf]
    %v150 = vld [vmem:[#allocation5 + $0xe4] sm:$0xff]
    %v151 = vld [vmem:[#allocation5 + $0xec] sm:$0xf]
    %v152 = vld [vmem:[#allocation5 + $0xf0] sm:$0xff]
    %v153 = vld [vmem:[#allocation5 + $0xf8] sm:$0xf]
    %v154 = vld [vmem:[#allocation5 + $0xfc] sm:$0xff]
    %v155 = vld [vmem:[#allocation5 + $0x104] sm:$0xf]
    %v156 = vld [vmem:[#allocation5 + $0x108] sm:$0xff]
    %v157 = vld [vmem:[#allocation5 + $0x110] sm:$0xf]
    %v158 = vld [vmem:[#allocation5 + $0x114] sm:$0xff]
    %v159 = vld [vmem:[#allocation5 + $0x11c] sm:$0xf]
    %v160 = vld [vmem:[#allocation5 + $0x120] sm:$0xff]
    %v161 = vld [vmem:[#allocation5 + $0x128] sm:$0xf]
    %v162 = vld [vmem:[#allocation5 + $0x12c] sm:$0xff]
    %v163 = vld [vmem:[#allocation5 + $0x134] sm:$0xf]
    %v164 = vld [vmem:[#allocation5 + $0x138] sm:$0xff]
    %v165 = vld [vmem:[#allocation5 + $0x140] sm:$0xf]
    %v166 = vld [vmem:[#allocation5 + $0x144] sm:$0xff]
    %v167 = vld [vmem:[#allocation5 + $0x14c] sm:$0xf]
    %v168 = vld [vmem:[#allocation5 + $0x150] sm:$0xff]
    %v169 = vld [vmem:[#allocation5 + $0x158] sm:$0xf]
    %v170 = vld [vmem:[#allocation5 + $0x15c] sm:$0xff]
    %v171 = vld [vmem:[#allocation5 + $0x164] sm:$0xf]
    %v172 = vld [vmem:[#allocation5 + $0x168] sm:$0xff]
    %v173 = vld [vmem:[#allocation5 + $0x170] sm:$0xf]
    %v174 = vld [vmem:[#allocation5 + $0x174] sm:$0xff]
    %v175 = vld [vmem:[#allocation5 + $0x17c] sm:$0xf]
    %v176 = vld [vmem:[#allocation5 + $0x180] sm:$0xff]
    %v177 = vld [vmem:[#allocation5 + $0x188] sm:$0xf]
    %v178 = vld [vmem:[#allocation5 + $0x18c] sm:$0xff]
    %v179 = vld [vmem:[#allocation5 + $0x194] sm:$0xf]
    %v180 = vld [vmem:[#allocation5 + $0x198] sm:$0xff]
    %v181 = vld [vmem:[#allocation5 + $0x1a0] sm:$0xf]
    %v182 = vld [vmem:[#allocation5 + $0x1a4] sm:$0xff]
    %v183 = vld [vmem:[#allocation5 + $0x1ac] sm:$0xf]
    %v184 = vld [vmem:[#allocation5 + $0x1b0] sm:$0xff]
    %v185 = vld [vmem:[#allocation5 + $0x1b8] sm:$0xf]
    %v186 = vld [vmem:[#allocation5 + $0x1bc] sm:$0xff]
    %v187 = vld [vmem:[#allocation5 + $0x1c4] sm:$0xf]
    %v188 = vld [vmem:[#allocation5 + $0x1c8] sm:$0xff]
    %v189 = vld [vmem:[#allocation5 + $0x1d0] sm:$0xf]
    %v190 = vld [vmem:[#allocation5 + $0x1d4] sm:$0xff]
    %v191 = vld [vmem:[#allocation5 + $0x1dc] sm:$0xf]
    %v192 = vld [vmem:[#allocation5 + $0x1e0] sm:$0xff]
    %v193 = vld [vmem:[#allocation5 + $0x1e8] sm:$0xf]
    %v194 = vld [vmem:[#allocation5 + $0x1ec] sm:$0xff]
    %v195 = vld [vmem:[#allocation5 + $0x1f4] sm:$0xf]
    %v196 = vld [vmem:[#allocation5 + $0x1f8] sm:$0xff]
    %v197 = vld [vmem:[#allocation5 + $0x200] sm:$0xf]
    %v198 = vld [vmem:[#allocation5 + $0x204] sm:$0xff]
    %v199 = vld [vmem:[#allocation5 + $0x20c] sm:$0xf]
    %v200 = vld [vmem:[#allocation5 + $0x210] sm:$0xff]
    %v201 = vld [vmem:[#allocation5 + $0x218] sm:$0xf]
    %v202 = vld [vmem:[#allocation5 + $0x21c] sm:$0xff]
    %v203 = vld [vmem:[#allocation5 + $0x224] sm:$0xf]
    %v204 = vld [vmem:[#allocation5 + $0x228] sm:$0xff]
    %v205 = vld [vmem:[#allocation5 + $0x230] sm:$0xf]
    %v206 = vld [vmem:[#allocation5 + $0x234] sm:$0xff]
    %v207 = vld [vmem:[#allocation5 + $0x23c] sm:$0xf]
    %v208 = vld [vmem:[#allocation5 + $0x240] sm:$0xff]
    %v209 = vld [vmem:[#allocation5 + $0x248] sm:$0xf]
    %v210 = vld [vmem:[#allocation5 + $0x24c] sm:$0xff]
    %v211 = vld [vmem:[#allocation5 + $0x254] sm:$0xf]
    %v212 = vld [vmem:[#allocation5 + $0x258] sm:$0xff]
    %v213 = vld [vmem:[#allocation5 + $0x260] sm:$0xf]
    %v214 = vld [vmem:[#allocation5 + $0x264] sm:$0xff]
    %v215 = vld [vmem:[#allocation5 + $0x26c] sm:$0xf]
    %v216 = vld [vmem:[#allocation5 + $0x270] sm:$0xff]
    %v217 = vld [vmem:[#allocation5 + $0x278] sm:$0xf]
    %v218 = vld [vmem:[#allocation5 + $0x27c] sm:$0xff]
    %v219 = vld [vmem:[#allocation5 + $0x284] sm:$0xf]
    %v220 = vld [vmem:[#allocation5 + $0x288] sm:$0xff]
    %v221 = vld [vmem:[#allocation5 + $0x290] sm:$0xf]
    %v222 = vld [vmem:[#allocation5 + $0x294] sm:$0xff]
    %v223 = vld [vmem:[#allocation5 + $0x29c] sm:$0xf]
    %v224 = vld [vmem:[#allocation5 + $0x2a0] sm:$0xff]
    %v225 = vld [vmem:[#allocation5 + $0x2a8] sm:$0xf]
    %v226 = vld [vmem:[#allocation5 + $0x2ac] sm:$0xff]
    %v227 = vld [vmem:[#allocation5 + $0x2b4] sm:$0xf]
    %v228 = vld [vmem:[#allocation5 + $0x2b8] sm:$0xff]
    %v229 = vld [vmem:[#allocation5 + $0x2c0] sm:$0xf]
    %v230 = vld [vmem:[#allocation5 + $0x2c4] sm:$0xff]
    %v231 = vld [vmem:[#allocation5 + $0x2cc] sm:$0xf]
    %v232 = vld [vmem:[#allocation5 + $0x2d0] sm:$0xff]
    %v233 = vld [vmem:[#allocation5 + $0x2d8] sm:$0xf]
    %v234 = vld [vmem:[#allocation5 + $0x2dc] sm:$0xff]
    %v235 = vld [vmem:[#allocation5 + $0x2e4] sm:$0xf]
    %v236 = vld [vmem:[#allocation5 + $0x2e8] sm:$0xff]
    %v237 = vld [vmem:[#allocation5 + $0x2f0] sm:$0xf]
    %v238 = vld [vmem:[#allocation5 + $0x2f4] sm:$0xff]
    %v239 = vld [vmem:[#allocation5 + $0x2fc] sm:$0xf]
    %v240 = vld [vmem:[#allocation5 + $0x300] sm:$0xff]
    %v241 = vld [vmem:[#allocation5 + $0x308] sm:$0xf]
    %v242 = vld [vmem:[#allocation5 + $0x30c] sm:$0xff]
    %v243 = vld [vmem:[#allocation5 + $0x314] sm:$0xf]
    %v244 = vld [vmem:[#allocation5 + $0x318] sm:$0xff]
    %v245 = vld [vmem:[#allocation5 + $0x320] sm:$0xf]
    %v246 = vld [vmem:[#allocation5 + $0x324] sm:$0xff]
    %v247 = vld [vmem:[#allocation5 + $0x32c] sm:$0xf]
    %v248 = vld [vmem:[#allocation5 + $0x330] sm:$0xff]
    %v249 = vld [vmem:[#allocation5 + $0x338] sm:$0xf]
    %v250 = vld [vmem:[#allocation5 + $0x33c] sm:$0xff]
    %v251 = vld [vmem:[#allocation5 + $0x344] sm:$0xf]
    %v252 = vld [vmem:[#allocation5 + $0x348] sm:$0xff]
    %v253 = vld [vmem:[#allocation5 + $0x350] sm:$0xf]
    %v254 = vld [vmem:[#allocation5 + $0x354] sm:$0xff]
    %v255 = vld [vmem:[#allocation5 + $0x35c] sm:$0xf]
    %v256 = vld [vmem:[#allocation5 + $0x360] sm:$0xff]
    %v257 = vld [vmem:[#allocation5 + $0x368] sm:$0xf]
    %v258 = vld [vmem:[#allocation5 + $0x36c] sm:$0xff]
    %v259 = vld [vmem:[#allocation5 + $0x374] sm:$0xf]
    %v260 = vld [vmem:[#allocation5 + $0x378] sm:$0xff]
    %v261 = vld [vmem:[#allocation5 + $0x380] sm:$0xf]
    %v262 = vld [vmem:[#allocation5 + $0x384] sm:$0xff]
    %v263 = vld [vmem:[#allocation5 + $0x38c] sm:$0xf]
    %v264 = vld [vmem:[#allocation5 + $0x390] sm:$0xff]
    %v265 = vld [vmem:[#allocation5 + $0x398] sm:$0xf]
    %v266 = vld [vmem:[#allocation5 + $0x39c] sm:$0xff]
    %v267 = vld [vmem:[#allocation5 + $0x3a4] sm:$0xf]
    %v268 = vld [vmem:[#allocation5 + $0x3a8] sm:$0xff]
    %v269 = vld [vmem:[#allocation5 + $0x3b0] sm:$0xf]
    %v270 = vld [vmem:[#allocation5 + $0x3b4] sm:$0xff]
    %v271 = vld [vmem:[#allocation5 + $0x3bc] sm:$0xf]
    %v272 = vld [vmem:[#allocation5 + $0x3c0] sm:$0xff]
    %v273 = vld [vmem:[#allocation5 + $0x3c8] sm:$0xf]
    %v274 = vld [vmem:[#allocation5 + $0x3cc] sm:$0xff]
    %v275 = vld [vmem:[#allocation5 + $0x3d4] sm:$0xf]
    %v276 = vld [vmem:[#allocation5 + $0x3d8] sm:$0xff]
    %v277 = vld [vmem:[#allocation5 + $0x3e0] sm:$0xf]
    %v278 = vld [vmem:[#allocation5 + $0x3e4] sm:$0xff]
    %v279 = vld [vmem:[#allocation5 + $0x3ec] sm:$0xf]
    %v280 = vld [vmem:[#allocation5 + $0x3f0] sm:$0xff]
    %v281 = vld [vmem:[#allocation5 + $0x3f8] sm:$0xf]
    %v282 = vld [vmem:[#allocation5 + $0x3fc] sm:$0xff]
    %v283 = vld [vmem:[#allocation5 + $0x404] sm:$0xf]
    %v284 = vld [vmem:[#allocation5 + $0x408] sm:$0xff]
    %v285 = vld [vmem:[#allocation5 + $0x410] sm:$0xf]
    %v286 = vld [vmem:[#allocation5 + $0x414] sm:$0xff]
    %v287 = vld [vmem:[#allocation5 + $0x41c] sm:$0xf]
    %v288 = vld [vmem:[#allocation5 + $0x420] sm:$0xff]
    %v289 = vld [vmem:[#allocation5 + $0x428] sm:$0xf]
    %v290 = vld [vmem:[#allocation5 + $0x42c] sm:$0xff]
    %v291 = vld [vmem:[#allocation5 + $0x434] sm:$0xf]
    %v292 = vld [vmem:[#allocation5 + $0x438] sm:$0xff]
    %v293 = vld [vmem:[#allocation5 + $0x440] sm:$0xf]
    %v294 = vld [vmem:[#allocation5 + $0x444] sm:$0xff]
    %v295 = vld [vmem:[#allocation5 + $0x44c] sm:$0xf]
    %v296 = vld [vmem:[#allocation5 + $0x450] sm:$0xff]
    %v297 = vld [vmem:[#allocation5 + $0x458] sm:$0xf]
    %v298 = vld [vmem:[#allocation5 + $0x45c] sm:$0xff]
    %v299 = vld [vmem:[#allocation5 + $0x464] sm:$0xf]
    %v300 = vld [vmem:[#allocation5 + $0x468] sm:$0xff]
    %v301 = vld [vmem:[#allocation5 + $0x470] sm:$0xf]
    %v302 = vld [vmem:[#allocation5 + $0x474] sm:$0xff]
    %v303 = vld [vmem:[#allocation5 + $0x47c] sm:$0xf]
    %v304 = vld [vmem:[#allocation5 + $0x480] sm:$0xff]
    %v305 = vld [vmem:[#allocation5 + $0x488] sm:$0xf]
    %v306 = vld [vmem:[#allocation5 + $0x48c] sm:$0xff]
    %v307 = vld [vmem:[#allocation5 + $0x494] sm:$0xf]
    %v308 = vld [vmem:[#allocation7] sm:$0x7]
    %v310 = vperm.slane %v308, 0
    %v311 = vperm.slane %v308, 1
    %v312 = vperm.slane %v308, 2
    %v324 = vunpack.c.l.b16 %v104
    %v325 = vunpack.c.h.b16 %v104
    %v326 = vunpack.c.l.b16 %v105
    %v327 = vunpack.c.h.b16 %v105
    %v328 = vunpack.c.l.b16 %v106
    %v329 = vunpack.c.h.b16 %v106
    %v330 = vunpack.c.l.b16 %v107
    %v331 = vunpack.c.l.b16 %v108
    %v332 = vunpack.c.h.b16 %v108
    %v333 = vunpack.c.l.b16 %v109
    %v334 = vunpack.c.h.b16 %v109
    %v335 = vunpack.c.l.b16 %v110
    %v336 = vunpack.c.h.b16 %v110
    %v337 = vunpack.c.l.b16 %v111
    %v338 = vpack.c.b16 %v331, %v324
    %v339 = vpack.c.b16 %v332, %v325
    %v340 = vpack.c.b16 %v333, %v326
    %v341 = vpack.c.b16 %v334, %v327
    %v342 = vpack.c.b16 %v335, %v328
    %v343 = vpack.c.b16 %v336, %v329
    %v344 = vpack.c.b16 %v337, %v330
    %v547 = vunpack.c.l.b16 %v112
    %v548 = vunpack.c.h.b16 %v112
    %v549 = vunpack.c.l.b16 %v113
    %v550 = vunpack.c.l.b16 %v114
    %v551 = vunpack.c.h.b16 %v114
    %v552 = vunpack.c.l.b16 %v115
    %v553 = vunpack.c.l.b16 %v116
    %v554 = vunpack.c.h.b16 %v116
    %v555 = vunpack.c.l.b16 %v117
    %v556 = vunpack.c.l.b16 %v118
    %v557 = vunpack.c.h.b16 %v118
    %v558 = vunpack.c.l.b16 %v119
    %v559 = vunpack.c.l.b16 %v120
    %v560 = vunpack.c.h.b16 %v120
    %v561 = vunpack.c.l.b16 %v121
    %v562 = vunpack.c.l.b16 %v122
    %v563 = vunpack.c.h.b16 %v122
    %v564 = vunpack.c.l.b16 %v123
    %v565 = vunpack.c.l.b16 %v124
    %v566 = vunpack.c.h.b16 %v124
    %v567 = vunpack.c.l.b16 %v125
    %v568 = vunpack.c.l.b16 %v126
    %v569 = vunpack.c.h.b16 %v126
    %v570 = vunpack.c.l.b16 %v127
    %v571 = vunpack.c.l.b16 %v128
    %v572 = vunpack.c.h.b16 %v128
    %v573 = vunpack.c.l.b16 %v129
    %v574 = vunpack.c.l.b16 %v130
    %v575 = vunpack.c.h.b16 %v130
    %v576 = vunpack.c.l.b16 %v131
    %v577 = vunpack.c.l.b16 %v132
    %v578 = vunpack.c.h.b16 %v132
    %v579 = vunpack.c.l.b16 %v133
    %v580 = vunpack.c.l.b16 %v134
    %v581 = vunpack.c.h.b16 %v134
    %v582 = vunpack.c.l.b16 %v135
    %v583 = vunpack.c.l.b16 %v136
    %v584 = vunpack.c.h.b16 %v136
    %v585 = vunpack.c.l.b16 %v137
    %v586 = vunpack.c.l.b16 %v138
    %v587 = vunpack.c.h.b16 %v138
    %v588 = vunpack.c.l.b16 %v139
    %v589 = vunpack.c.l.b16 %v140
    %v590 = vunpack.c.h.b16 %v140
    %v591 = vunpack.c.l.b16 %v141
    %v592 = vunpack.c.l.b16 %v142
    %v593 = vunpack.c.h.b16 %v142
    %v594 = vunpack.c.l.b16 %v143
    %v595 = vunpack.c.l.b16 %v144
    %v596 = vunpack.c.h.b16 %v144
    %v597 = vunpack.c.l.b16 %v145
    %v598 = vunpack.c.l.b16 %v146
    %v599 = vunpack.c.h.b16 %v146
    %v600 = vunpack.c.l.b16 %v147
    %v601 = vunpack.c.l.b16 %v148
    %v602 = vunpack.c.h.b16 %v148
    %v603 = vunpack.c.l.b16 %v149
    %v604 = vunpack.c.l.b16 %v150
    %v605 = vunpack.c.h.b16 %v150
    %v606 = vunpack.c.l.b16 %v151
    %v607 = vunpack.c.l.b16 %v152
    %v608 = vunpack.c.h.b16 %v152
    %v609 = vunpack.c.l.b16 %v153
    %v610 = vunpack.c.l.b16 %v154
    %v611 = vunpack.c.h.b16 %v154
    %v612 = vunpack.c.l.b16 %v155
    %v613 = vunpack.c.l.b16 %v156
    %v614 = vunpack.c.h.b16 %v156
    %v615 = vunpack.c.l.b16 %v157
    %v616 = vunpack.c.l.b16 %v158
    %v617 = vunpack.c.h.b16 %v158
    %v618 = vunpack.c.l.b16 %v159
    %v619 = vunpack.c.l.b16 %v160
    %v620 = vunpack.c.h.b16 %v160
    %v621 = vunpack.c.l.b16 %v161
    %v622 = vunpack.c.l.b16 %v162
    %v623 = vunpack.c.h.b16 %v162
    %v624 = vunpack.c.l.b16 %v163
    %v625 = vunpack.c.l.b16 %v164
    %v626 = vunpack.c.h.b16 %v164
    %v627 = vunpack.c.l.b16 %v165
    %v628 = vunpack.c.l.b16 %v166
    %v629 = vunpack.c.h.b16 %v166
    %v630 = vunpack.c.l.b16 %v167
    %v631 = vunpack.c.l.b16 %v168
    %v632 = vunpack.c.h.b16 %v168
    %v633 = vunpack.c.l.b16 %v169
    %v634 = vunpack.c.l.b16 %v170
    %v635 = vunpack.c.h.b16 %v170
    %v636 = vunpack.c.l.b16 %v171
    %v637 = vunpack.c.l.b16 %v172
    %v638 = vunpack.c.h.b16 %v172
    %v639 = vunpack.c.l.b16 %v173
    %v640 = vunpack.c.l.b16 %v174
    %v641 = vunpack.c.h.b16 %v174
    %v642 = vunpack.c.l.b16 %v175
    %v643 = vunpack.c.l.b16 %v176
    %v644 = vunpack.c.h.b16 %v176
    %v645 = vunpack.c.l.b16 %v177
    %v646 = vunpack.c.l.b16 %v178
    %v647 = vunpack.c.h.b16 %v178
    %v648 = vunpack.c.l.b16 %v179
    %v649 = vunpack.c.l.b16 %v180
    %v650 = vunpack.c.h.b16 %v180
    %v651 = vunpack.c.l.b16 %v181
    %v652 = vunpack.c.l.b16 %v182
    %v653 = vunpack.c.h.b16 %v182
    %v654 = vunpack.c.l.b16 %v183
    %v655 = vunpack.c.l.b16 %v184
    %v656 = vunpack.c.h.b16 %v184
    %v657 = vunpack.c.l.b16 %v185
    %v658 = vunpack.c.l.b16 %v186
    %v659 = vunpack.c.h.b16 %v186
    %v660 = vunpack.c.l.b16 %v187
    %v661 = vunpack.c.l.b16 %v188
    %v662 = vunpack.c.h.b16 %v188
    %v663 = vunpack.c.l.b16 %v189
    %v664 = vunpack.c.l.b16 %v190
    %v665 = vunpack.c.h.b16 %v190
    %v666 = vunpack.c.l.b16 %v191
    %v667 = vunpack.c.l.b16 %v192
    %v668 = vunpack.c.h.b16 %v192
    %v669 = vunpack.c.l.b16 %v193
    %v670 = vunpack.c.l.b16 %v194
    %v671 = vunpack.c.h.b16 %v194
    %v672 = vunpack.c.l.b16 %v195
    %v673 = vunpack.c.l.b16 %v196
    %v674 = vunpack.c.h.b16 %v196
    %v675 = vunpack.c.l.b16 %v197
    %v676 = vunpack.c.l.b16 %v198
    %v677 = vunpack.c.h.b16 %v198
    %v678 = vunpack.c.l.b16 %v199
    %v679 = vunpack.c.l.b16 %v200
    %v680 = vunpack.c.h.b16 %v200
    %v681 = vunpack.c.l.b16 %v201
    %v682 = vunpack.c.l.b16 %v202
    %v683 = vunpack.c.h.b16 %v202
    %v684 = vunpack.c.l.b16 %v203
    %v685 = vunpack.c.l.b16 %v204
    %v686 = vunpack.c.h.b16 %v204
    %v687 = vunpack.c.l.b16 %v205
    %v688 = vunpack.c.l.b16 %v206
    %v689 = vunpack.c.h.b16 %v206
    %v690 = vunpack.c.l.b16 %v207
    %v691 = vunpack.c.l.b16 %v208
    %v692 = vunpack.c.h.b16 %v208
    %v693 = vunpack.c.l.b16 %v209
    %v694 = vunpack.c.l.b16 %v210
    %v695 = vunpack.c.h.b16 %v210
    %v696 = vunpack.c.l.b16 %v211
    %v697 = vunpack.c.l.b16 %v212
    %v698 = vunpack.c.h.b16 %v212
    %v699 = vunpack.c.l.b16 %v213
    %v700 = vunpack.c.l.b16 %v214
    %v701 = vunpack.c.h.b16 %v214
    %v702 = vunpack.c.l.b16 %v215
    %v703 = vunpack.c.l.b16 %v216
    %v704 = vunpack.c.h.b16 %v216
    %v705 = vunpack.c.l.b16 %v217
    %v706 = vunpack.c.l.b16 %v218
    %v707 = vunpack.c.h.b16 %v218
    %v708 = vunpack.c.l.b16 %v219
    %v709 = vunpack.c.l.b16 %v220
    %v710 = vunpack.c.h.b16 %v220
    %v711 = vunpack.c.l.b16 %v221
    %v712 = vunpack.c.l.b16 %v222
    %v713 = vunpack.c.h.b16 %v222
    %v714 = vunpack.c.l.b16 %v223
    %v715 = vunpack.c.l.b16 %v224
    %v716 = vunpack.c.h.b16 %v224
    %v717 = vunpack.c.l.b16 %v225
    %v718 = vunpack.c.l.b16 %v226
    %v719 = vunpack.c.h.b16 %v226
    %v720 = vunpack.c.l.b16 %v227
    %v721 = vunpack.c.l.b16 %v228
    %v722 = vunpack.c.h.b16 %v228
    %v723 = vunpack.c.l.b16 %v229
    %v724 = vunpack.c.l.b16 %v230
    %v725 = vunpack.c.h.b16 %v230
    %v726 = vunpack.c.l.b16 %v231
    %v727 = vunpack.c.l.b16 %v232
    %v728 = vunpack.c.h.b16 %v232
    %v729 = vunpack.c.l.b16 %v233
    %v730 = vunpack.c.l.b16 %v234
    %v731 = vunpack.c.h.b16 %v234
    %v732 = vunpack.c.l.b16 %v235
    %v733 = vunpack.c.l.b16 %v236
    %v734 = vunpack.c.h.b16 %v236
    %v735 = vunpack.c.l.b16 %v237
    %v736 = vunpack.c.l.b16 %v238
    %v737 = vunpack.c.h.b16 %v238
    %v738 = vunpack.c.l.b16 %v239
    %v739 = vunpack.c.l.b16 %v240
    %v740 = vunpack.c.h.b16 %v240
    %v741 = vunpack.c.l.b16 %v241
    %v742 = vunpack.c.l.b16 %v242
    %v743 = vunpack.c.h.b16 %v242
    %v744 = vunpack.c.l.b16 %v243
    %v745 = vunpack.c.l.b16 %v244
    %v746 = vunpack.c.h.b16 %v244
    %v747 = vunpack.c.l.b16 %v245
    %v748 = vunpack.c.l.b16 %v246
    %v749 = vunpack.c.h.b16 %v246
    %v750 = vunpack.c.l.b16 %v247
    %v751 = vunpack.c.l.b16 %v248
    %v752 = vunpack.c.h.b16 %v248
    %v753 = vunpack.c.l.b16 %v249
    %v754 = vunpack.c.l.b16 %v250
    %v755 = vunpack.c.h.b16 %v250
    %v756 = vunpack.c.l.b16 %v251
    %v757 = vunpack.c.l.b16 %v252
    %v758 = vunpack.c.h.b16 %v252
    %v759 = vunpack.c.l.b16 %v253
    %v760 = vunpack.c.l.b16 %v254
    %v761 = vunpack.c.h.b16 %v254
    %v762 = vunpack.c.l.b16 %v255
    %v763 = vunpack.c.l.b16 %v256
    %v764 = vunpack.c.h.b16 %v256
    %v765 = vunpack.c.l.b16 %v257
    %v766 = vunpack.c.l.b16 %v258
    %v767 = vunpack.c.h.b16 %v258
    %v768 = vunpack.c.l.b16 %v259
    %v769 = vunpack.c.l.b16 %v260
    %v770 = vunpack.c.h.b16 %v260
    %v771 = vunpack.c.l.b16 %v261
    %v772 = vunpack.c.l.b16 %v262
    %v773 = vunpack.c.h.b16 %v262
    %v774 = vunpack.c.l.b16 %v263
    %v775 = vunpack.c.l.b16 %v264
    %v776 = vunpack.c.h.b16 %v264
    %v777 = vunpack.c.l.b16 %v265
    %v778 = vunpack.c.l.b16 %v266
    %v779 = vunpack.c.h.b16 %v266
    %v780 = vunpack.c.l.b16 %v267
    %v781 = vunpack.c.l.b16 %v268
    %v782 = vunpack.c.h.b16 %v268
    %v783 = vunpack.c.l.b16 %v269
    %v784 = vunpack.c.l.b16 %v270
    %v785 = vunpack.c.h.b16 %v270
    %v786 = vunpack.c.l.b16 %v271
    %v787 = vunpack.c.l.b16 %v272
    %v788 = vunpack.c.h.b16 %v272
    %v789 = vunpack.c.l.b16 %v273
    %v790 = vunpack.c.l.b16 %v274
    %v791 = vunpack.c.h.b16 %v274
    %v792 = vunpack.c.l.b16 %v275
    %v793 = vunpack.c.l.b16 %v276
    %v794 = vunpack.c.h.b16 %v276
    %v795 = vunpack.c.l.b16 %v277
    %v796 = vunpack.c.l.b16 %v278
    %v797 = vunpack.c.h.b16 %v278
    %v798 = vunpack.c.l.b16 %v279
    %v799 = vunpack.c.l.b16 %v280
    %v800 = vunpack.c.h.b16 %v280
    %v801 = vunpack.c.l.b16 %v281
    %v802 = vunpack.c.l.b16 %v282
    %v803 = vunpack.c.h.b16 %v282
    %v804 = vunpack.c.l.b16 %v283
    %v805 = vunpack.c.l.b16 %v284
    %v806 = vunpack.c.h.b16 %v284
    %v807 = vunpack.c.l.b16 %v285
    %v808 = vunpack.c.l.b16 %v286
    %v809 = vunpack.c.h.b16 %v286
    %v810 = vunpack.c.l.b16 %v287
    %v811 = vunpack.c.l.b16 %v288
    %v812 = vunpack.c.h.b16 %v288
    %v813 = vunpack.c.l.b16 %v289
    %v814 = vunpack.c.l.b16 %v290
    %v815 = vunpack.c.h.b16 %v290
    %v816 = vunpack.c.l.b16 %v291
    %v817 = vunpack.c.l.b16 %v292
    %v818 = vunpack.c.h.b16 %v292
    %v819 = vunpack.c.l.b16 %v293
    %v820 = vunpack.c.l.b16 %v294
    %v821 = vunpack.c.h.b16 %v294
    %v822 = vunpack.c.l.b16 %v295
    %v823 = vunpack.c.l.b16 %v296
    %v824 = vunpack.c.h.b16 %v296
    %v825 = vunpack.c.l.b16 %v297
    %v826 = vunpack.c.l.b16 %v298
    %v827 = vunpack.c.h.b16 %v298
    %v828 = vunpack.c.l.b16 %v299
    %v829 = vunpack.c.l.b16 %v300
    %v830 = vunpack.c.h.b16 %v300
    %v831 = vunpack.c.l.b16 %v301
    %v832 = vunpack.c.l.b16 %v302
    %v833 = vunpack.c.h.b16 %v302
    %v834 = vunpack.c.l.b16 %v303
    %v835 = vunpack.c.l.b16 %v304
    %v836 = vunpack.c.h.b16 %v304
    %v837 = vunpack.c.l.b16 %v305
    %v838 = vunpack.c.l.b16 %v306
    %v839 = vunpack.c.h.b16 %v306
    %v840 = vunpack.c.l.b16 %v307
    %v841 = vpack.c.b16 %v550, %v547
    %v842 = vpack.c.b16 %v551, %v548
    %v843 = vpack.c.b16 %v552, %v549
    %v844 = vpack.c.b16 %v556, %v553
    %v845 = vpack.c.b16 %v557, %v554
    %v846 = vpack.c.b16 %v558, %v555
    %v847 = vpack.c.b16 %v562, %v559
    %v848 = vpack.c.b16 %v563, %v560
    %v849 = vpack.c.b16 %v564, %v561
    %v850 = vpack.c.b16 %v568, %v565
    %v851 = vpack.c.b16 %v569, %v566
    %v852 = vpack.c.b16 %v570, %v567
    %v853 = vpack.c.b16 %v574, %v571
    %v854 = vpack.c.b16 %v575, %v572
    %v855 = vpack.c.b16 %v576, %v573
    %v856 = vpack.c.b16 %v580, %v577
    %v857 = vpack.c.b16 %v581, %v578
    %v858 = vpack.c.b16 %v582, %v579
    %v859 = vpack.c.b16 %v586, %v583
    %v860 = vpack.c.b16 %v587, %v584
    %v861 = vpack.c.b16 %v588, %v585
    %v862 = vpack.c.b16 %v592, %v589
    %v863 = vpack.c.b16 %v593, %v590
    %v864 = vpack.c.b16 %v594, %v591
    %v865 = vpack.c.b16 %v598, %v595
    %v866 = vpack.c.b16 %v599, %v596
    %v867 = vpack.c.b16 %v600, %v597
    %v868 = vpack.c.b16 %v604, %v601
    %v869 = vpack.c.b16 %v605, %v602
    %v870 = vpack.c.b16 %v606, %v603
    %v871 = vpack.c.b16 %v610, %v607
    %v872 = vpack.c.b16 %v611, %v608
    %v873 = vpack.c.b16 %v612, %v609
    %v874 = vpack.c.b16 %v616, %v613
    %v875 = vpack.c.b16 %v617, %v614
    %v876 = vpack.c.b16 %v618, %v615
    %v877 = vpack.c.b16 %v622, %v619
    %v878 = vpack.c.b16 %v623, %v620
    %v879 = vpack.c.b16 %v624, %v621
    %v880 = vpack.c.b16 %v628, %v625
    %v881 = vpack.c.b16 %v629, %v626
    %v882 = vpack.c.b16 %v630, %v627
    %v883 = vpack.c.b16 %v634, %v631
    %v884 = vpack.c.b16 %v635, %v632
    %v885 = vpack.c.b16 %v636, %v633
    %v886 = vpack.c.b16 %v640, %v637
    %v887 = vpack.c.b16 %v641, %v638
    %v888 = vpack.c.b16 %v642, %v639
    %v889 = vpack.c.b16 %v646, %v643
    %v890 = vpack.c.b16 %v647, %v644
    %v891 = vpack.c.b16 %v648, %v645
    %v892 = vpack.c.b16 %v652, %v649
    %v893 = vpack.c.b16 %v653, %v650
    %v894 = vpack.c.b16 %v654, %v651
    %v895 = vpack.c.b16 %v658, %v655
    %v896 = vpack.c.b16 %v659, %v656
    %v897 = vpack.c.b16 %v660, %v657
    %v898 = vpack.c.b16 %v664, %v661
    %v899 = vpack.c.b16 %v665, %v662
    %v900 = vpack.c.b16 %v666, %v663
    %v901 = vpack.c.b16 %v670, %v667
    %v902 = vpack.c.b16 %v671, %v668
    %v903 = vpack.c.b16 %v672, %v669
    %v904 = vpack.c.b16 %v676, %v673
    %v905 = vpack.c.b16 %v677, %v674
    %v906 = vpack.c.b16 %v678, %v675
    %v907 = vpack.c.b16 %v682, %v679
    %v908 = vpack.c.b16 %v683, %v680
    %v909 = vpack.c.b16 %v684, %v681
    %v910 = vpack.c.b16 %v688, %v685
    %v911 = vpack.c.b16 %v689, %v686
    %v912 = vpack.c.b16 %v690, %v687
    %v913 = vpack.c.b16 %v694, %v691
    %v914 = vpack.c.b16 %v695, %v692
    %v915 = vpack.c.b16 %v696, %v693
    %v916 = vpack.c.b16 %v700, %v697
    %v917 = vpack.c.b16 %v701, %v698
    %v918 = vpack.c.b16 %v702, %v699
    %v919 = vpack.c.b16 %v706, %v703
    %v920 = vpack.c.b16 %v707, %v704
    %v921 = vpack.c.b16 %v708, %v705
    %v922 = vpack.c.b16 %v712, %v709
    %v923 = vpack.c.b16 %v713, %v710
    %v924 = vpack.c.b16 %v714, %v711
    %v925 = vpack.c.b16 %v718, %v715
    %v926 = vpack.c.b16 %v719, %v716
    %v927 = vpack.c.b16 %v720, %v717
    %v928 = vpack.c.b16 %v724, %v721
    %v929 = vpack.c.b16 %v725, %v722
    %v930 = vpack.c.b16 %v726, %v723
    %v931 = vpack.c.b16 %v730, %v727
    %v932 = vpack.c.b16 %v731, %v728
    %v933 = vpack.c.b16 %v732, %v729
    %v934 = vpack.c.b16 %v736, %v733
    %v935 = vpack.c.b16 %v737, %v734
    %v936 = vpack.c.b16 %v738, %v735
    %v937 = vpack.c.b16 %v742, %v739
    %v938 = vpack.c.b16 %v743, %v740
    %v939 = vpack.c.b16 %v744, %v741
    %v940 = vpack.c.b16 %v748, %v745
    %v941 = vpack.c.b16 %v749, %v746
    %v942 = vpack.c.b16 %v750, %v747
    %v943 = vpack.c.b16 %v754, %v751
    %v944 = vpack.c.b16 %v755, %v752
    %v945 = vpack.c.b16 %v756, %v753
    %v946 = vpack.c.b16 %v760, %v757
    %v947 = vpack.c.b16 %v761, %v758
    %v948 = vpack.c.b16 %v762, %v759
    %v949 = vpack.c.b16 %v766, %v763
    %v950 = vpack.c.b16 %v767, %v764
    %v951 = vpack.c.b16 %v768, %v765
    %v952 = vpack.c.b16 %v772, %v769
    %v953 = vpack.c.b16 %v773, %v770
    %v954 = vpack.c.b16 %v774, %v771
    %v955 = vpack.c.b16 %v778, %v775
    %v956 = vpack.c.b16 %v779, %v776
    %v957 = vpack.c.b16 %v780, %v777
    %v958 = vpack.c.b16 %v784, %v781
    %v959 = vpack.c.b16 %v785, %v782
    %v960 = vpack.c.b16 %v786, %v783
    %v961 = vpack.c.b16 %v790, %v787
    %v962 = vpack.c.b16 %v791, %v788
    %v963 = vpack.c.b16 %v792, %v789
    %v964 = vpack.c.b16 %v796, %v793
    %v965 = vpack.c.b16 %v797, %v794
    %v966 = vpack.c.b16 %v798, %v795
    %v967 = vpack.c.b16 %v802, %v799
    %v968 = vpack.c.b16 %v803, %v800
    %v969 = vpack.c.b16 %v804, %v801
    %v970 = vpack.c.b16 %v808, %v805
    %v971 = vpack.c.b16 %v809, %v806
    %v972 = vpack.c.b16 %v810, %v807
    %v973 = vpack.c.b16 %v814, %v811
    %v974 = vpack.c.b16 %v815, %v812
    %v975 = vpack.c.b16 %v816, %v813
    %v976 = vpack.c.b16 %v820, %v817
    %v977 = vpack.c.b16 %v821, %v818
    %v978 = vpack.c.b16 %v822, %v819
    %v979 = vpack.c.b16 %v826, %v823
    %v980 = vpack.c.b16 %v827, %v824
    %v981 = vpack.c.b16 %v828, %v825
    %v982 = vpack.c.b16 %v832, %v829
    %v983 = vpack.c.b16 %v833, %v830
    %v984 = vpack.c.b16 %v834, %v831
    %v985 = vpack.c.b16 %v838, %v835
    %v986 = vpack.c.b16 %v839, %v836
    %v987 = vpack.c.b16 %v840, %v837
    %vm1135 = vcmask 130048
    %v1137 = vsel %vm1135, %v344, 0
    %1139 = vmatpush.bf16.msra.mxu0 %v862
    %1140 = vmatpush.bf16.msra.mxu0 %v859
    %1141 = vmatpush.bf16.msra.mxu0 %v856
    %1142 = vmatpush.bf16.msra.mxu0 %v853
    %1143 = vmatpush.bf16.msra.mxu0 %v850
    %1144 = vmatpush.bf16.msra.mxu0 %v847
    %1145 = vmatpush.bf16.msra.mxu0 %v844
    %1146 = vmatpush.bf16.msra.mxu0 %v841
    %1147 = vmatmul.bf16.gmra.mxu0 %v338
    %v1148 = vpop.f32.mrf.mxu0
    %v1149 = vadd.f32 %v310, %v1148
    %v1150 = vpop.f32.mrf.mxu0
    %v1151 = vadd.f32 %v310, %v1150
    %1152 = vdwg.mxu0
    %1153 = vmatpush.bf16.msra.mxu0 %v886
    %1154 = vmatpush.bf16.msra.mxu0 %v883
    %1155 = vmatpush.bf16.msra.mxu0 %v880
    %1156 = vmatpush.bf16.msra.mxu0 %v877
    %1157 = vmatpush.bf16.msra.mxu0 %v874
    %1158 = vmatpush.bf16.msra.mxu0 %v871
    %1159 = vmatpush.bf16.msra.mxu0 %v868
    %1160 = vmatpush.bf16.msra.mxu0 %v865
    %1161 = vmatmul.bf16.gmra.mxu0 %v339
    %v1162 = vpop.f32.mrf.mxu0
    %v1163 = vadd.f32 %v1149, %v1162
    %v1164 = vpop.f32.mrf.mxu0
    %v1165 = vadd.f32 %v1151, %v1164
    %1166 = vdwg.mxu0
    %1167 = vmatpush.bf16.msra.mxu0 %v910
    %1168 = vmatpush.bf16.msra.mxu0 %v907
    %1169 = vmatpush.bf16.msra.mxu0 %v904
    %1170 = vmatpush.bf16.msra.mxu0 %v901
    %1171 = vmatpush.bf16.msra.mxu0 %v898
    %1172 = vmatpush.bf16.msra.mxu0 %v895
    %1173 = vmatpush.bf16.msra.mxu0 %v892
    %1174 = vmatpush.bf16.msra.mxu0 %v889
    %1175 = vmatmul.bf16.gmra.mxu0 %v340
    %v1176 = vpop.f32.mrf.mxu0
    %v1177 = vadd.f32 %v1163, %v1176
    %v1178 = vpop.f32.mrf.mxu0
    %v1179 = vadd.f32 %v1165, %v1178
    %1180 = vdwg.mxu0
    %1181 = vmatpush.bf16.msra.mxu0 %v934
    %1182 = vmatpush.bf16.msra.mxu0 %v931
    %1183 = vmatpush.bf16.msra.mxu0 %v928
    %1184 = vmatpush.bf16.msra.mxu0 %v925
    %1185 = vmatpush.bf16.msra.mxu0 %v922
    %1186 = vmatpush.bf16.msra.mxu0 %v919
    %1187 = vmatpush.bf16.msra.mxu0 %v916
    %1188 = vmatpush.bf16.msra.mxu0 %v913
    %1189 = vmatmul.bf16.gmra.mxu0 %v341
    %v1190 = vpop.f32.mrf.mxu0
    %v1191 = vadd.f32 %v1177, %v1190
    %v1192 = vpop.f32.mrf.mxu0
    %v1193 = vadd.f32 %v1179, %v1192
    %1194 = vdwg.mxu0
    %1195 = vmatpush.bf16.msra.mxu0 %v958
    %1196 = vmatpush.bf16.msra.mxu0 %v955
    %1197 = vmatpush.bf16.msra.mxu0 %v952
    %1198 = vmatpush.bf16.msra.mxu0 %v949
    %1199 = vmatpush.bf16.msra.mxu0 %v946
    %1200 = vmatpush.bf16.msra.mxu0 %v943
    %1201 = vmatpush.bf16.msra.mxu0 %v940
    %1202 = vmatpush.bf16.msra.mxu0 %v937
    %1203 = vmatmul.bf16.gmra.mxu0 %v342
    %v1204 = vpop.f32.mrf.mxu0
    %v1205 = vadd.f32 %v1191, %v1204
    %v1206 = vpop.f32.mrf.mxu0
    %v1207 = vadd.f32 %v1193, %v1206
    %1208 = vdwg.mxu0
    %1209 = vmatpush.bf16.msra.mxu0 %v982
    %1210 = vmatpush.bf16.msra.mxu0 %v979
    %1211 = vmatpush.bf16.msra.mxu0 %v976
    %1212 = vmatpush.bf16.msra.mxu0 %v973
    %1213 = vmatpush.bf16.msra.mxu0 %v970
    %1214 = vmatpush.bf16.msra.mxu0 %v967
    %1215 = vmatpush.bf16.msra.mxu0 %v964
    %1216 = vmatpush.bf16.msra.mxu0 %v961
    %1217 = vmatmul.bf16.gmra.mxu0 %v343
    %v1218 = vpop.f32.mrf.mxu0
    %v1219 = vadd.f32 %v1205, %v1218
    %v1220 = vpop.f32.mrf.mxu0
    %v1221 = vadd.f32 %v1207, %v1220
    %1222 = vdwg.mxu0
    %1223 = vmatpush.bf16.msra.mxu0 0
    %1224 = vmatpush.bf16.msra.mxu0 0
    %1225 = vmatpush.bf16.msra.mxu0 0
    %1226 = vmatpush.bf16.msra.mxu0 0
    %1227 = vmatpush.bf16.msra.mxu0 0
    %1228 = vmatpush.bf16.msra.mxu0 0
    %1229 = vmatpush.bf16.msra.mxu0 0
    %1230 = vmatpush.bf16.msra.mxu0 %v985
    %1231 = vmatmul.bf16.gmra.mxu0 %v1137
    %v1232 = vpop.f32.mrf.mxu0
    %v1233 = vadd.f32 %v1219, %v1232
    %v1234 = vpop.f32.mrf.mxu0
    %v1235 = vadd.f32 %v1221, %v1234
    %1236 = vdwg.mxu0
    %1237 = vmatpush.bf16.msra.mxu0 %v863
    %1238 = vmatpush.bf16.msra.mxu0 %v860
    %1239 = vmatpush.bf16.msra.mxu0 %v857
    %1240 = vmatpush.bf16.msra.mxu0 %v854
    %1241 = vmatpush.bf16.msra.mxu0 %v851
    %1242 = vmatpush.bf16.msra.mxu0 %v848
    %1243 = vmatpush.bf16.msra.mxu0 %v845
    %1244 = vmatpush.bf16.msra.mxu0 %v842
    %1245 = vmatmul.bf16.gmra.mxu0 %v338
    %v1246 = vpop.f32.mrf.mxu0
    %v1247 = vadd.f32 %v311, %v1246
    %v1248 = vpop.f32.mrf.mxu0
    %v1249 = vadd.f32 %v311, %v1248
    %1250 = vdwg.mxu0
    %1251 = vmatpush.bf16.msra.mxu0 %v887
    %1252 = vmatpush.bf16.msra.mxu0 %v884
    %1253 = vmatpush.bf16.msra.mxu0 %v881
    %1254 = vmatpush.bf16.msra.mxu0 %v878
    %1255 = vmatpush.bf16.msra.mxu0 %v875
    %1256 = vmatpush.bf16.msra.mxu0 %v872
    %1257 = vmatpush.bf16.msra.mxu0 %v869
    %1258 = vmatpush.bf16.msra.mxu0 %v866
    %1259 = vmatmul.bf16.gmra.mxu0 %v339
    %v1260 = vpop.f32.mrf.mxu0
    %v1261 = vadd.f32 %v1247, %v1260
    %v1262 = vpop.f32.mrf.mxu0
    %v1263 = vadd.f32 %v1249, %v1262
    %1264 = vdwg.mxu0
    %1265 = vmatpush.bf16.msra.mxu0 %v911
    %1266 = vmatpush.bf16.msra.mxu0 %v908
    %1267 = vmatpush.bf16.msra.mxu0 %v905
    %1268 = vmatpush.bf16.msra.mxu0 %v902
    %1269 = vmatpush.bf16.msra.mxu0 %v899
    %1270 = vmatpush.bf16.msra.mxu0 %v896
    %1271 = vmatpush.bf16.msra.mxu0 %v893
    %1272 = vmatpush.bf16.msra.mxu0 %v890
    %1273 = vmatmul.bf16.gmra.mxu0 %v340
    %v1274 = vpop.f32.mrf.mxu0
    %v1275 = vadd.f32 %v1261, %v1274
    %v1276 = vpop.f32.mrf.mxu0
    %v1277 = vadd.f32 %v1263, %v1276
    %1278 = vdwg.mxu0
    %1279 = vmatpush.bf16.msra.mxu0 %v935
    %1280 = vmatpush.bf16.msra.mxu0 %v932
    %1281 = vmatpush.bf16.msra.mxu0 %v929
    %1282 = vmatpush.bf16.msra.mxu0 %v926
    %1283 = vmatpush.bf16.msra.mxu0 %v923
    %1284 = vmatpush.bf16.msra.mxu0 %v920
    %1285 = vmatpush.bf16.msra.mxu0 %v917
    %1286 = vmatpush.bf16.msra.mxu0 %v914
    %1287 = vmatmul.bf16.gmra.mxu0 %v341
    %v1288 = vpop.f32.mrf.mxu0
    %v1289 = vadd.f32 %v1275, %v1288
    %v1290 = vpop.f32.mrf.mxu0
    %v1291 = vadd.f32 %v1277, %v1290
    %1292 = vdwg.mxu0
    %1293 = vmatpush.bf16.msra.mxu0 %v959
    %1294 = vmatpush.bf16.msra.mxu0 %v956
    %1295 = vmatpush.bf16.msra.mxu0 %v953
    %1296 = vmatpush.bf16.msra.mxu0 %v950
    %1297 = vmatpush.bf16.msra.mxu0 %v947
    %1298 = vmatpush.bf16.msra.mxu0 %v944
    %1299 = vmatpush.bf16.msra.mxu0 %v941
    %1300 = vmatpush.bf16.msra.mxu0 %v938
    %1301 = vmatmul.bf16.gmra.mxu0 %v342
    %v1302 = vpop.f32.mrf.mxu0
    %v1303 = vadd.f32 %v1289, %v1302
    %v1304 = vpop.f32.mrf.mxu0
    %v1305 = vadd.f32 %v1291, %v1304
    %1306 = vdwg.mxu0
    %1307 = vmatpush.bf16.msra.mxu0 %v983
    %1308 = vmatpush.bf16.msra.mxu0 %v980
    %1309 = vmatpush.bf16.msra.mxu0 %v977
    %1310 = vmatpush.bf16.msra.mxu0 %v974
    %1311 = vmatpush.bf16.msra.mxu0 %v971
    %1312 = vmatpush.bf16.msra.mxu0 %v968
    %1313 = vmatpush.bf16.msra.mxu0 %v965
    %1314 = vmatpush.bf16.msra.mxu0 %v962
    %1315 = vmatmul.bf16.gmra.mxu0 %v343
    %v1316 = vpop.f32.mrf.mxu0
    %v1317 = vadd.f32 %v1303, %v1316
    %v1318 = vpop.f32.mrf.mxu0
    %v1319 = vadd.f32 %v1305, %v1318
    %1320 = vdwg.mxu0
    %1321 = vmatpush.bf16.msra.mxu0 0
    %1322 = vmatpush.bf16.msra.mxu0 0
    %1323 = vmatpush.bf16.msra.mxu0 0
    %1324 = vmatpush.bf16.msra.mxu0 0
    %1325 = vmatpush.bf16.msra.mxu0 0
    %1326 = vmatpush.bf16.msra.mxu0 0
    %1327 = vmatpush.bf16.msra.mxu0 0
    %1328 = vmatpush.bf16.msra.mxu0 %v986
    %1329 = vmatmul.bf16.gmra.mxu0 %v1137
    %v1330 = vpop.f32.mrf.mxu0
    %v1331 = vadd.f32 %v1317, %v1330
    %v1332 = vpop.f32.mrf.mxu0
    %v1333 = vadd.f32 %v1319, %v1332
    %1334 = vdwg.mxu0
    %1335 = vmatpush.bf16.msra.mxu0 %v864
    %1336 = vmatpush.bf16.msra.mxu0 %v861
    %1337 = vmatpush.bf16.msra.mxu0 %v858
    %1338 = vmatpush.bf16.msra.mxu0 %v855
    %1339 = vmatpush.bf16.msra.mxu0 %v852
    %1340 = vmatpush.bf16.msra.mxu0 %v849
    %1341 = vmatpush.bf16.msra.mxu0 %v846
    %1342 = vmatpush.bf16.msra.mxu0 %v843
    %1343 = vmatmul.bf16.gmra.mxu0 %v338
    %v1344 = vpop.f32.mrf.mxu0
    %v1345 = vadd.f32 %v312, %v1344
    %v1346 = vpop.f32.mrf.mxu0
    %v1347 = vadd.f32 %v312, %v1346
    %1348 = vdwg.mxu0
    %1349 = vmatpush.bf16.msra.mxu0 %v888
    %1350 = vmatpush.bf16.msra.mxu0 %v885
    %1351 = vmatpush.bf16.msra.mxu0 %v882
    %1352 = vmatpush.bf16.msra.mxu0 %v879
    %1353 = vmatpush.bf16.msra.mxu0 %v876
    %1354 = vmatpush.bf16.msra.mxu0 %v873
    %1355 = vmatpush.bf16.msra.mxu0 %v870
    %1356 = vmatpush.bf16.msra.mxu0 %v867
    %1357 = vmatmul.bf16.gmra.mxu0 %v339
    %v1358 = vpop.f32.mrf.mxu0
    %v1359 = vadd.f32 %v1345, %v1358
    %v1360 = vpop.f32.mrf.mxu0
    %v1361 = vadd.f32 %v1347, %v1360
    %1362 = vdwg.mxu0
    %1363 = vmatpush.bf16.msra.mxu0 %v912
    %1364 = vmatpush.bf16.msra.mxu0 %v909
    %1365 = vmatpush.bf16.msra.mxu0 %v906
    %1366 = vmatpush.bf16.msra.mxu0 %v903
    %1367 = vmatpush.bf16.msra.mxu0 %v900
    %1368 = vmatpush.bf16.msra.mxu0 %v897
    %1369 = vmatpush.bf16.msra.mxu0 %v894
    %1370 = vmatpush.bf16.msra.mxu0 %v891
    %1371 = vmatmul.bf16.gmra.mxu0 %v340
    %v1372 = vpop.f32.mrf.mxu0
    %v1373 = vadd.f32 %v1359, %v1372
    %v1374 = vpop.f32.mrf.mxu0
    %v1375 = vadd.f32 %v1361, %v1374
    %1376 = vdwg.mxu0
    %1377 = vmatpush.bf16.msra.mxu0 %v936
    %1378 = vmatpush.bf16.msra.mxu0 %v933
    %1379 = vmatpush.bf16.msra.mxu0 %v930
    %1380 = vmatpush.bf16.msra.mxu0 %v927
    %1381 = vmatpush.bf16.msra.mxu0 %v924
    %1382 = vmatpush.bf16.msra.mxu0 %v921
    %1383 = vmatpush.bf16.msra.mxu0 %v918
    %1384 = vmatpush.bf16.msra.mxu0 %v915
    %1385 = vmatmul.bf16.gmra.mxu0 %v341
    %v1386 = vpop.f32.mrf.mxu0
    %v1387 = vadd.f32 %v1373, %v1386
    %v1388 = vpop.f32.mrf.mxu0
    %v1389 = vadd.f32 %v1375, %v1388
    %1390 = vdwg.mxu0
    %1391 = vmatpush.bf16.msra.mxu0 %v960
    %1392 = vmatpush.bf16.msra.mxu0 %v957
    %1393 = vmatpush.bf16.msra.mxu0 %v954
    %1394 = vmatpush.bf16.msra.mxu0 %v951
    %1395 = vmatpush.bf16.msra.mxu0 %v948
    %1396 = vmatpush.bf16.msra.mxu0 %v945
    %1397 = vmatpush.bf16.msra.mxu0 %v942
    %1398 = vmatpush.bf16.msra.mxu0 %v939
    %1399 = vmatmul.bf16.gmra.mxu0 %v342
    %v1400 = vpop.f32.mrf.mxu0
    %v1401 = vadd.f32 %v1387, %v1400
    %v1402 = vpop.f32.mrf.mxu0
    %v1403 = vadd.f32 %v1389, %v1402
    %1404 = vdwg.mxu0
    %1405 = vmatpush.bf16.msra.mxu0 %v984
    %1406 = vmatpush.bf16.msra.mxu0 %v981
    %1407 = vmatpush.bf16.msra.mxu0 %v978
    %1408 = vmatpush.bf16.msra.mxu0 %v975
    %1409 = vmatpush.bf16.msra.mxu0 %v972
    %1410 = vmatpush.bf16.msra.mxu0 %v969
    %1411 = vmatpush.bf16.msra.mxu0 %v966
    %1412 = vmatpush.bf16.msra.mxu0 %v963
    %1413 = vmatmul.bf16.gmra.mxu0 %v343
    %v1414 = vpop.f32.mrf.mxu0
    %v1415 = vadd.f32 %v1401, %v1414
    %v1416 = vpop.f32.mrf.mxu0
    %v1417 = vadd.f32 %v1403, %v1416
    %1418 = vdwg.mxu0
    %1419 = vmatpush.bf16.msra.mxu0 0
    %1420 = vmatpush.bf16.msra.mxu0 0
    %1421 = vmatpush.bf16.msra.mxu0 0
    %1422 = vmatpush.bf16.msra.mxu0 0
    %1423 = vmatpush.bf16.msra.mxu0 0
    %1424 = vmatpush.bf16.msra.mxu0 0
    %1425 = vmatpush.bf16.msra.mxu0 0
    %1426 = vmatpush.bf16.msra.mxu0 %v987
    %1427 = vmatmul.bf16.gmra.mxu0 %v1137
    %v1428 = vpop.f32.mrf.mxu0
    %v1429 = vadd.f32 %v1415, %v1428
    %v1430 = vpop.f32.mrf.mxu0
    %v1431 = vadd.f32 %v1417, %v1430
    %1432 = vdwg.mxu0
    %v1433 = vmax.f32 %v1233, 0.0
    %v1434 = vmax.f32 %v1331, 0.0
    %v1435 = vmax.f32 %v1429, 0.0
    %v1436 = vmax.f32 %v1235, 0.0
    %v1437 = vmax.f32 %v1333, 0.0
    %v1438 = vmax.f32 %v1431, 0.0
    %v1439 = vpack.c.bf16 %v1436, %v1433
    %v1440 = vpack.c.bf16 %v1437, %v1434
    %v1441 = vpack.c.bf16 %v1438, %v1435
    %v1442 = vld [vmem:[#allocation8] sm:$0xf]
    %v1443 = vld [vmem:[#allocation8 + $0x4] sm:$0xf]
    %v1444 = vld [vmem:[#allocation8 + $0x8] sm:$0xf]
    %v1445 = vld [vmem:[#allocation8 + $0xc] sm:$0xf]
    %v1446 = vld [vmem:[#allocation8 + $0x10] sm:$0xf]
    %v1447 = vld [vmem:[#allocation8 + $0x14] sm:$0xf]
    %v1448 = vld [vmem:[#allocation8 + $0x18] sm:$0xf]
    %v1449 = vld [vmem:[#allocation8 + $0x1c] sm:$0xf]
    %v1450 = vld [vmem:[#allocation8 + $0x20] sm:$0xf]
    %v1451 = vld [vmem:[#allocation8 + $0x24] sm:$0xf]
    %v1452 = vld [vmem:[#allocation8 + $0x28] sm:$0xf]
    %v1453 = vld [vmem:[#allocation8 + $0x2c] sm:$0xf]
    %v1454 = vld [vmem:[#allocation8 + $0x30] sm:$0xf]
    %v1455 = vld [vmem:[#allocation8 + $0x34] sm:$0xf]
    %v1456 = vld [vmem:[#allocation8 + $0x38] sm:$0xf]
    %v1457 = vld [vmem:[#allocation8 + $0x3c] sm:$0xf]
    %v1458 = vld [vmem:[#allocation8 + $0x40] sm:$0xf]
    %v1459 = vld [vmem:[#allocation8 + $0x44] sm:$0xf]
    %v1460 = vld [vmem:[#allocation8 + $0x48] sm:$0xf]
    %v1461 = vld [vmem:[#allocation8 + $0x4c] sm:$0xf]
    %v1462 = vld [vmem:[#allocation8 + $0x50] sm:$0xf]
    %v1463 = vld [vmem:[#allocation8 + $0x54] sm:$0xf]
    %v1464 = vld [vmem:[#allocation8 + $0x58] sm:$0xf]
    %v1465 = vld [vmem:[#allocation8 + $0x5c] sm:$0xf]
    %v1466 = vld [vmem:[#allocation8 + $0x60] sm:$0xf]
    %v1467 = vld [vmem:[#allocation8 + $0x64] sm:$0xf]
    %v1468 = vld [vmem:[#allocation8 + $0x68] sm:$0xf]
    %v1469 = vld [vmem:[#allocation8 + $0x6c] sm:$0xf]
    %v1470 = vld [vmem:[#allocation8 + $0x70] sm:$0xf]
    %v1471 = vld [vmem:[#allocation8 + $0x74] sm:$0xf]
    %v1472 = vld [vmem:[#allocation8 + $0x78] sm:$0xf]
    %v1473 = vld [vmem:[#allocation8 + $0x7c] sm:$0xf]
    %v1474 = vld [vmem:[#allocation8 + $0x80] sm:$0xf]
    %v1475 = vld [vmem:[#allocation8 + $0x84] sm:$0xf]
    %v1476 = vld [vmem:[#allocation8 + $0x88] sm:$0xf]
    %v1477 = vld [vmem:[#allocation8 + $0x8c] sm:$0xf]
    %v1478 = vld [vmem:[#allocation8 + $0x90] sm:$0xf]
    %v1479 = vld [vmem:[#allocation8 + $0x94] sm:$0xf]
    %v1480 = vld [vmem:[#allocation8 + $0x98] sm:$0xf]
    %v1481 = vld [vmem:[#allocation8 + $0x9c] sm:$0xf]
    %v1482 = vld [vmem:[#allocation8 + $0xa0] sm:$0xf]
    %v1483 = vld [vmem:[#allocation8 + $0xa4] sm:$0xf]
    %v1484 = vld [vmem:[#allocation8 + $0xa8] sm:$0xf]
    %v1485 = vld [vmem:[#allocation8 + $0xac] sm:$0xf]
    %v1486 = vld [vmem:[#allocation8 + $0xb0] sm:$0xf]
    %v1487 = vld [vmem:[#allocation8 + $0xb4] sm:$0xf]
    %v1488 = vld [vmem:[#allocation8 + $0xb8] sm:$0xf]
    %v1489 = vld [vmem:[#allocation8 + $0xbc] sm:$0xf]
    %v1490 = vld [vmem:[%s4] sm:$0x1]
    %v1492 = vperm.slane %v1490, 0
    %v1542 = vunpack.c.l.b16 %v1442
    %v1543 = vunpack.c.l.b16 %v1443
    %v1544 = vunpack.c.l.b16 %v1444
    %v1545 = vunpack.c.l.b16 %v1445
    %v1546 = vunpack.c.l.b16 %v1446
    %v1547 = vunpack.c.l.b16 %v1447
    %v1548 = vunpack.c.l.b16 %v1448
    %v1549 = vunpack.c.l.b16 %v1449
    %v1550 = vunpack.c.l.b16 %v1450
    %v1551 = vunpack.c.l.b16 %v1451
    %v1552 = vunpack.c.l.b16 %v1452
    %v1553 = vunpack.c.l.b16 %v1453
    %v1554 = vunpack.c.l.b16 %v1454
    %v1555 = vunpack.c.l.b16 %v1455
    %v1556 = vunpack.c.l.b16 %v1456
    %v1557 = vunpack.c.l.b16 %v1457
    %v1558 = vunpack.c.l.b16 %v1458
    %v1559 = vunpack.c.l.b16 %v1459
    %v1560 = vunpack.c.l.b16 %v1460
    %v1561 = vunpack.c.l.b16 %v1461
    %v1562 = vunpack.c.l.b16 %v1462
    %v1563 = vunpack.c.l.b16 %v1463
    %v1564 = vunpack.c.l.b16 %v1464
    %v1565 = vunpack.c.l.b16 %v1465
    %v1566 = vunpack.c.l.b16 %v1466
    %v1567 = vunpack.c.l.b16 %v1467
    %v1568 = vunpack.c.l.b16 %v1468
    %v1569 = vunpack.c.l.b16 %v1469
    %v1570 = vunpack.c.l.b16 %v1470
    %v1571 = vunpack.c.l.b16 %v1471
    %v1572 = vunpack.c.l.b16 %v1472
    %v1573 = vunpack.c.l.b16 %v1473
    %v1574 = vunpack.c.l.b16 %v1474
    %v1575 = vunpack.c.l.b16 %v1475
    %v1576 = vunpack.c.l.b16 %v1476
    %v1577 = vunpack.c.l.b16 %v1477
    %v1578 = vunpack.c.l.b16 %v1478
    %v1579 = vunpack.c.l.b16 %v1479
    %v1580 = vunpack.c.l.b16 %v1480
    %v1581 = vunpack.c.l.b16 %v1481
    %v1582 = vunpack.c.l.b16 %v1482
    %v1583 = vunpack.c.l.b16 %v1483
    %v1584 = vunpack.c.l.b16 %v1484
    %v1585 = vunpack.c.l.b16 %v1485
    %v1586 = vunpack.c.l.b16 %v1486
    %v1587 = vunpack.c.l.b16 %v1487
    %v1588 = vunpack.c.l.b16 %v1488
    %v1589 = vunpack.c.l.b16 %v1489
    %v1590 = vpack.c.b16 %v1543, %v1542
    %v1591 = vpack.c.b16 %v1545, %v1544
    %v1592 = vpack.c.b16 %v1547, %v1546
    %v1593 = vpack.c.b16 %v1549, %v1548
    %v1594 = vpack.c.b16 %v1551, %v1550
    %v1595 = vpack.c.b16 %v1553, %v1552
    %v1596 = vpack.c.b16 %v1555, %v1554
    %v1597 = vpack.c.b16 %v1557, %v1556
    %v1598 = vpack.c.b16 %v1559, %v1558
    %v1599 = vpack.c.b16 %v1561, %v1560
    %v1600 = vpack.c.b16 %v1563, %v1562
    %v1601 = vpack.c.b16 %v1565, %v1564
    %v1602 = vpack.c.b16 %v1567, %v1566
    %v1603 = vpack.c.b16 %v1569, %v1568
    %v1604 = vpack.c.b16 %v1571, %v1570
    %v1605 = vpack.c.b16 %v1573, %v1572
    %v1606 = vpack.c.b16 %v1575, %v1574
    %v1607 = vpack.c.b16 %v1577, %v1576
    %v1608 = vpack.c.b16 %v1579, %v1578
    %v1609 = vpack.c.b16 %v1581, %v1580
    %v1610 = vpack.c.b16 %v1583, %v1582
    %v1611 = vpack.c.b16 %v1585, %v1584
    %v1612 = vpack.c.b16 %v1587, %v1586
    %v1613 = vpack.c.b16 %v1589, %v1588
    %1638 = vmatpush.bf16.msra.mxu0 %v1597
    %1639 = vmatpush.bf16.msra.mxu0 %v1596
    %1640 = vmatpush.bf16.msra.mxu0 %v1595
    %1641 = vmatpush.bf16.msra.mxu0 %v1594
    %1642 = vmatpush.bf16.msra.mxu0 %v1593
    %1643 = vmatpush.bf16.msra.mxu0 %v1592
    %1644 = vmatpush.bf16.msra.mxu0 %v1591
    %1645 = vmatpush.bf16.msra.mxu0 %v1590
    %1646 = vmatmul.bf16.gmra.mxu0 %v1439
    %v1647 = vpop.f32.mrf.mxu0
    %v1648 = vadd.f32 %v1492, %v1647
    %v1649 = vpop.f32.mrf.mxu0
    %v1650 = vadd.f32 %v1492, %v1649
    %1651 = vdwg.mxu0
    %1652 = vmatpush.bf16.msra.mxu0 %v1605
    %1653 = vmatpush.bf16.msra.mxu0 %v1604
    %1654 = vmatpush.bf16.msra.mxu0 %v1603
    %1655 = vmatpush.bf16.msra.mxu0 %v1602
    %1656 = vmatpush.bf16.msra.mxu0 %v1601
    %1657 = vmatpush.bf16.msra.mxu0 %v1600
    %1658 = vmatpush.bf16.msra.mxu0 %v1599
    %1659 = vmatpush.bf16.msra.mxu0 %v1598
    %1660 = vmatmul.bf16.gmra.mxu0 %v1440
    %v1661 = vpop.f32.mrf.mxu0
    %v1662 = vadd.f32 %v1648, %v1661
    %v1663 = vpop.f32.mrf.mxu0
    %v1664 = vadd.f32 %v1650, %v1663
    %1665 = vdwg.mxu0
    %1666 = vmatpush.bf16.msra.mxu0 %v1613
    %1667 = vmatpush.bf16.msra.mxu0 %v1612
    %1668 = vmatpush.bf16.msra.mxu0 %v1611
    %1669 = vmatpush.bf16.msra.mxu0 %v1610
    %1670 = vmatpush.bf16.msra.mxu0 %v1609
    %1671 = vmatpush.bf16.msra.mxu0 %v1608
    %1672 = vmatpush.bf16.msra.mxu0 %v1607
    %1673 = vmatpush.bf16.msra.mxu0 %v1606
    %1674 = vmatmul.bf16.gmra.mxu0 %v1441
    %v1675 = vpop.f32.mrf.mxu0
    %v1676 = vadd.f32 %v1662, %v1675
    %v1677 = vpop.f32.mrf.mxu0
    %v1678 = vadd.f32 %v1664, %v1677
    %1679 = vdwg.mxu0
    %v1680 = vmax.f32 %v1676, 0.0
    %v1681 = vmax.f32 %v1678, 0.0
    %v1682 = vpack.c.bf16 %v1681, %v1680
    %v1683 = vld [vmem:[#allocation10] sm:$0xf]
    %v1684 = vld [vmem:[#allocation10 + $0x4] sm:$0xf]
    %v1685 = vld [vmem:[#allocation10 + $0x8] sm:$0xf]
    %v1686 = vld [vmem:[#allocation10 + $0xc] sm:$0xf]
    %v1687 = vld [vmem:[#allocation10 + $0x10] sm:$0xf]
    %v1688 = vld [vmem:[#allocation10 + $0x14] sm:$0xf]
    %v1689 = vld [vmem:[#allocation10 + $0x18] sm:$0xf]
    %v1690 = vld [vmem:[#allocation10 + $0x1c] sm:$0xf]
    %v1691 = vld [vmem:[#allocation10 + $0x20] sm:$0xf]
    %v1692 = vld [vmem:[#allocation10 + $0x24] sm:$0xf]
    %v1693 = vld [vmem:[#allocation10 + $0x28] sm:$0xf]
    %v1694 = vld [vmem:[#allocation10 + $0x2c] sm:$0xf]
    %v1695 = vld [vmem:[#allocation10 + $0x30] sm:$0xf]
    %v1696 = vld [vmem:[#allocation10 + $0x34] sm:$0xf]
    %v1697 = vld [vmem:[#allocation10 + $0x38] sm:$0xf]
    %v1698 = vld [vmem:[#allocation10 + $0x3c] sm:$0xf]
    %v1699 = vld [vmem:[%s6] sm:$0x1]
    %v1701 = vperm.slane %v1699, 0
    %v1719 = vunpack.c.l.b16 %v1683
    %v1720 = vunpack.c.l.b16 %v1684
    %v1721 = vunpack.c.l.b16 %v1685
    %v1722 = vunpack.c.l.b16 %v1686
    %v1723 = vunpack.c.l.b16 %v1687
    %v1724 = vunpack.c.l.b16 %v1688
    %v1725 = vunpack.c.l.b16 %v1689
    %v1726 = vunpack.c.l.b16 %v1690
    %v1727 = vunpack.c.l.b16 %v1691
    %v1728 = vunpack.c.l.b16 %v1692
    %v1729 = vunpack.c.l.b16 %v1693
    %v1730 = vunpack.c.l.b16 %v1694
    %v1731 = vunpack.c.l.b16 %v1695
    %v1732 = vunpack.c.l.b16 %v1696
    %v1733 = vunpack.c.l.b16 %v1697
    %v1734 = vunpack.c.l.b16 %v1698
    %v1735 = vpack.c.b16 %v1720, %v1719
    %v1736 = vpack.c.b16 %v1722, %v1721
    %v1737 = vpack.c.b16 %v1724, %v1723
    %v1738 = vpack.c.b16 %v1726, %v1725
    %v1739 = vpack.c.b16 %v1728, %v1727
    %v1740 = vpack.c.b16 %v1730, %v1729
    %v1741 = vpack.c.b16 %v1732, %v1731
    %v1742 = vpack.c.b16 %v1734, %v1733
    %1751 = vmatpush.bf16.msra.mxu0 %v1742
    %1752 = vmatpush.bf16.msra.mxu0 %v1741
    %1753 = vmatpush.bf16.msra.mxu0 %v1740
    %1754 = vmatpush.bf16.msra.mxu0 %v1739
    %1755 = vmatpush.bf16.msra.mxu0 %v1738
    %1756 = vmatpush.bf16.msra.mxu0 %v1737
    %1757 = vmatpush.bf16.msra.mxu0 %v1736
    %1758 = vmatpush.bf16.msra.mxu0 %v1735
    %1759 = vmatmul.bf16.gmra.mxu0 %v1682
    %v1760 = vpop.f32.mrf.mxu0
    %v1761 = vadd.f32 %v1701, %v1760
    %v1762 = vpop.f32.mrf.mxu0
    %v1763 = vadd.f32 %v1701, %v1762
    %1764 = vdwg.mxu0
    %1765 = vst [vmem:[#allocation11] sm:$0xff] %v1761
    %1766 = vst [vmem:[#allocation11 + $0x8] sm:$0xff] %v1763
    // Predicated region
    $region50: #{tpu_custom_call.1} parent=1 // pred_check
      _
    $region51: #{tpu_custom_call.1} parent=1 // pred_check_branch
      %1768 = sbr.rel (0) target = $region53
    $region52: #{tpu_custom_call.1} parent=1 // pred_region
      %1770 = vsyncadd [#allocation4], 0
      %s1771 = sshll.u32 [#allocation11], 4
      %s1772 = int_to_ptr.vmem [resolvable:$true] %s1771
      %s1773 = sshll.u32 %s7, 4
      %s1774 = int_to_ptr.hbm [resolvable:$true] %s1773
      %1779 = dma.vmem_to_hbm [thread:$0]  %s1772, 256, %s1774, [#allocation4], 128, 128, 8
    $region53: #{tpu_custom_call.1} parent=1 // pred_fallthru
      _
    // Predicated region
    $region54: #{tpu_custom_call.1} parent=1 // pred_check
      _
    $region55: #{tpu_custom_call.1} parent=1 // pred_check_branch
      %1781 = sbr.rel (0) target = $region57
    $region56: #{tpu_custom_call.1} parent=1 // pred_region
      %1783 = dma.done [#allocation4], 256
    $region57: #{tpu_custom_call.1} parent=1 // pred_fallthru
      _
    %1784 = vsyncpa [#allocation3], 1
    %1785 = vsyncpa [#allocation6], 1
    %1786 = vsyncpa [#allocation9], 1
    %1787 = vsyncpa [#allocation4], 1

</llo_original>
